<compile_context>
chip_gen: v7x
topology: tpu7x:2x2x1
jax: 0.10.0
libtpu: 0.0.40
codegen_flags: <defaults>
</compile_context>

<pallas_src>
import functools
import math

import jax
import jax.numpy as jnp
from jax.experimental import pallas as pl
from jax.experimental.pallas import tpu as pltpu


# ----------------------------------------------------------------------------
# Fused kernel: projections + all heads' attention + output projection.
# grid = (B, num_q_tiles), dimension_semantics = ("parallel", "arbitrary").
# Per step:
#   query tile  : (tq, dim_in)
#   key / value : (S,  dim_in)   (read only at qi == 0; projections cached)
#   output tile : (tq, dim_in)
# ----------------------------------------------------------------------------
def _mha_fused_kernel(q_ref, k_ref, v_ref,
                      wq_ref, bq_ref, wk_ref, bk_ref, wv_ref, bv_ref,
                      wo_ref, bo_ref, o_ref,
                      kproj_ref, vproj_ref,
                      *, num_heads, dim_q, dim_k):
    # --- K/V projections: once per batch element, cached in VMEM scratch. ---
    @pl.when(pl.program_id(1) == 0)
    def _():
        key = k_ref[0]                     # (S, dim_in)
        value = v_ref[0]                   # (S, dim_in)
        kproj_ref[...] = (jnp.dot(key, wk_ref[...],
                                  preferred_element_type=jnp.float32)
                          + bk_ref[0]).astype(kproj_ref.dtype)
        vproj_ref[...] = (jnp.dot(value, wv_ref[...],
                                  preferred_element_type=jnp.float32)
                          + bv_ref[0]).astype(vproj_ref.dtype)

    query = q_ref[0]                       # (tq, dim_in)
    # One fused projection matmul for all heads' queries.
    q_all = (jnp.dot(query, wq_ref[...], preferred_element_type=jnp.float32)
             + bq_ref[0]).astype(query.dtype)          # (tq, H*dim_q)

    k_all = kproj_ref[...]                 # (S, H*dim_k)  (cached)
    v_all = vproj_ref[...]                 # (S, H*dim_k)  (cached)

    scale = 1.0 / math.sqrt(dim_q)

    # Static head loop; H is small and static, slices are compile-time.
    # TODO(synk): for H >~ 8 switch to lax.fori_loop(..., unroll=True) with
    # pl.ds/pl.multiple_of head slices to bound vreg live ranges.
    ctxs = []
    for h in range(num_heads):
        q_h = q_all[:, h * dim_q:(h + 1) * dim_q]        # (tq, dim_q)
        k_h = k_all[:, h * dim_k:(h + 1) * dim_k]        # (S,  dim_k)
        v_h = v_all[:, h * dim_k:(h + 1) * dim_k]        # (S,  dim_k)

        # scores = q_h @ k_h^T without materializing a transpose.
        scores = jax.lax.dot_general(
            q_h, k_h, (((1,), (1,)), ((), ())),
            preferred_element_type=jnp.float32) * scale   # (tq, S)

        m = jnp.max(scores, axis=-1, keepdims=True)
        p = jnp.exp(scores - m)                           # un-normalized probs
        rowsum = jnp.sum(p, axis=-1, keepdims=True)       # (tq, 1), f32

        # Deferred normalization: normalize the (tq, dim_k) context instead
        # of the (tq, S) probabilities.  Exact reciprocal preserves the 1e-4
        # validation tolerance.
        ctx = jnp.dot(p.astype(v_h.dtype), v_h,
                      preferred_element_type=jnp.float32)  # (tq, dim_k)
        ctxs.append(ctx * pl.reciprocal(rowsum, approx=False))

    # Single fused output projection over all heads: contracting dim H*dim_k
    # fills the MXU far better than H separate dim_k-wide dots.
    ctx_all = jnp.concatenate(ctxs, axis=-1).astype(wo_ref.dtype)  # (tq, H*dk)
    out = (jnp.dot(ctx_all, wo_ref[...], preferred_element_type=jnp.float32)
           + bo_ref[0])
    o_ref[0] = out.astype(o_ref.dtype)


def _pick_q_tile(seq_len):
    # 256 is a good default across generations (v5e's 16 MiB scoped default /
    # 128-wide MXU prefers 128-256; v6e/v7x amortize step overhead at >=256).
    for t in (256, 512, 128, 64, 32, 16, 8):
        if seq_len % t == 0:
            return t
    return seq_len  # TODO(synk): pad awkward S instead of a full-S tile.


def _vmem_limit_bytes(tq, S, dim_in, hq, hk, dtype_bytes):
    """Explicit scoped-VMEM budget (default 16/32 MiB is too small for big S)."""
    weights = (dim_in * hq + hq) + 2 * (dim_in * hk + hk) + hk * dim_in + dim_in
    io_blocks = tq * dim_in + 2 * S * dim_in + tq * dim_in   # q, k, v, out
    scratch = 2 * S * hk                                     # cached K/V proj
    inter = tq * (hq + 2 * S + hk + dim_in)                  # live intermediates
    total = dtype_bytes * (2 * (weights + io_blocks) + scratch + inter)
    # 2x headroom for compiler temporaries; clamp to stay under physical VMEM
    # on every generation (v7x has 64 MiB per TensorCore).
    return int(min(max(2 * total + (4 << 20), 32 << 20), 100 << 20))


@functools.partial(jax.jit, static_argnames=("compute_dtype",))
def multi_head_attention(query, key, value, params, compute_dtype=jnp.float32):
    """query/key/value: (B, S, dim_in). Returns (B, S, dim_in) in input dtype.

    compute_dtype=jnp.bfloat16 is the production/throughput setting (MXU is
    bf16-native); validation here uses f32 to hold the 1e-4 tolerance.
    """
    wq, bq, wk, bk, wv, bv, wo, bo = (
        params["wq"], params["bq"], params["wk"], params["bk"],
        params["wv"], params["bv"], params["wo"], params["bo"],
    )
    B, S, dim_in = query.shape
    H, dim_q, _ = wq.shape
    dim_k = wk.shape[1]
    out_dtype = query.dtype

    # One-time wrapper-side layout plumbing: stack & transpose per-head
    # weights so the kernel computes x @ W directly (no in-kernel transposes).
    wq_t = jnp.transpose(wq, (2, 0, 1)).reshape(dim_in, H * dim_q)
    wk_t = jnp.transpose(wk, (2, 0, 1)).reshape(dim_in, H * dim_k)
    wv_t = jnp.transpose(wv, (2, 0, 1)).reshape(dim_in, H * dim_k)
    bq_f = bq.reshape(1, H * dim_q)
    bk_f = bk.reshape(1, H * dim_k)
    bv_f = bv.reshape(1, H * dim_k)
    wo_t = wo.T                                       # (H*dim_k, dim_in)
    bo_f = bo.reshape(1, dim_in)

    cd = compute_dtype
    query_c, key_c, value_c = (x.astype(cd) for x in (query, key, value))
    wq_t, wk_t, wv_t, wo_t = (w.astype(cd) for w in (wq_t, wk_t, wv_t, wo_t))
    bq_f, bk_f, bv_f, bo_f = (b.astype(jnp.float32)
                              for b in (bq_f, bk_f, bv_f, bo_f))

    tq = _pick_q_tile(S)
    nq = S // tq
    dtype_bytes = jnp.dtype(cd).itemsize
    vmem_limit = _vmem_limit_bytes(tq, S, dim_in, H * dim_q, H * dim_k,
                                   max(dtype_bytes, 4))

    q_spec = pl.BlockSpec((1, tq, dim_in), lambda b, qi: (b, qi, 0))
    # K/V block index only depends on b -> Pallas re-fetches only on b change.
    kv_spec = pl.BlockSpec((1, S, dim_in), lambda b, qi: (b, 0, 0))
    const2d = lambda r, c: pl.BlockSpec((r, c), lambda b, qi: (0, 0))

    kernel = functools.partial(_mha_fused_kernel,
                               num_heads=H, dim_q=dim_q, dim_k=dim_k)

    out = pl.pallas_call(
        kernel,
        out_shape=jax.ShapeDtypeStruct((B, S, dim_in), out_dtype),
        grid=(B, nq),
        in_specs=[
            q_spec, kv_spec, kv_spec,
            const2d(dim_in, H * dim_q), const2d(1, H * dim_q),
            const2d(dim_in, H * dim_k), const2d(1, H * dim_k),
            const2d(dim_in, H * dim_k), const2d(1, H * dim_k),
            const2d(H * dim_k, dim_in), const2d(1, dim_in),
        ],
        out_specs=pl.BlockSpec((1, tq, dim_in), lambda b, qi: (b, qi, 0)),
        scratch_shapes=[
            pltpu.VMEM((S, H * dim_k), cd),   # cached K projections
            pltpu.VMEM((S, H * dim_k), cd),   # cached V projections
        ],
        compiler_params=pltpu.CompilerParams(
            # qi must be "arbitrary": the K/V-projection scratch is filled at
            # qi == 0 and reused for qi > 0.  Megacore shards over B only.
            dimension_semantics=("parallel", "arbitrary"),
            vmem_limit_bytes=vmem_limit),
    )(query_c, key_c, value_c,
      wq_t, bq_f, wk_t, bk_f, wv_t, bv_f, wo_t, bo_f)
    return out


def _init_params(key, num_heads, dim_in, dim_q, dim_k):
    """Deterministic PyTorch-style (uniform +-1/sqrt(fan_in)) init."""
    ks = jax.random.split(key, 8)

    def u(k, shape, fan_in):
        bound = 1.0 / math.sqrt(fan_in)
        return jax.random.uniform(k, shape, jnp.float32, -bound, bound)

    return {
        "wq": u(ks[0], (num_heads, dim_q, dim_in), dim_in),
        "bq": u(ks[1], (num_heads, dim_q), dim_in),
        "wk": u(ks[2], (num_heads, dim_k, dim_in), dim_in),
        "bk": u(ks[3], (num_heads, dim_k), dim_in),
        "wv": u(ks[4], (num_heads, dim_k, dim_in), dim_in),
        "bv": u(ks[5], (num_heads, dim_k), dim_in),
        "wo": u(ks[6], (dim_in, num_heads * dim_k), num_heads * dim_k),
        "bo": u(ks[7], (dim_in,), num_heads * dim_k),
    }


def _reference(query, key, value, params):
    """Pure-JAX reference replicating the PyTorch module semantics."""
    H = params["wq"].shape[0]
    heads = []
    for h in range(H):
        q = query @ params["wq"][h].T + params["bq"][h]
        k = key @ params["wk"][h].T + params["bk"][h]
        v = value @ params["wv"][h].T + params["bv"][h]
        scores = (q @ jnp.swapaxes(k, -1, -2)) / math.sqrt(q.shape[-1])
        attn = jax.nn.softmax(scores, axis=-1)
        heads.append(attn @ v)
    concat = jnp.concatenate(heads, axis=-1)
    return concat @ params["wo"].T + params["bo"]


if __name__ == "__main__":
    num_heads, dim_in, dim_q, dim_k = 4, 32, 16, 16
    B, S = 2, 8

    root = jax.random.PRNGKey(0)
    kp, kq, kk, kv = jax.random.split(root, 4)
    params = _init_params(kp, num_heads, dim_in, dim_q, dim_k)
    query = jax.random.normal(kq, (B, S, dim_in), jnp.float32)
    key = jax.random.normal(kk, (B, S, dim_in), jnp.float32)
    value = jax.random.normal(kv, (B, S, dim_in), jnp.float32)

    out = multi_head_attention(query, key, value, params)
    out = jax.block_until_ready(out)

    ref = _reference(query, key, value, params)
    assert out.shape == (B, S, dim_in), out.shape
    assert jnp.allclose(out, ref, atol=1e-4, rtol=1e-4), float(
        jnp.max(jnp.abs(out - ref)))
    print("KERNEL_OK")
</pallas_src>

<mosaic_0001>
module attributes {stable_mosaic.version = 11 : i64} {
  func.func @_mha_fused_kernel(%arg0: i32, %arg1: i32, %arg2: memref<1x8x32xf32, #tpu.memory_space<vmem>>, %arg3: memref<1x8x32xf32, #tpu.memory_space<vmem>>, %arg4: memref<1x8x32xf32, #tpu.memory_space<vmem>>, %arg5: memref<32x64xf32, #tpu.memory_space<vmem>>, %arg6: memref<1x64xf32, #tpu.memory_space<vmem>>, %arg7: memref<32x64xf32, #tpu.memory_space<vmem>>, %arg8: memref<1x64xf32, #tpu.memory_space<vmem>>, %arg9: memref<32x64xf32, #tpu.memory_space<vmem>>, %arg10: memref<1x64xf32, #tpu.memory_space<vmem>>, %arg11: memref<64x32xf32, #tpu.memory_space<vmem>>, %arg12: memref<1x32xf32, #tpu.memory_space<vmem>>, %arg13: memref<1x8x32xf32, #tpu.memory_space<vmem>>, %arg14: memref<8x64xf32, #tpu.memory_space<vmem>>, %arg15: memref<8x64xf32, #tpu.memory_space<vmem>>) attributes {dimension_semantics = [#tpu.dimension_semantics<parallel>, #tpu.dimension_semantics<arbitrary>], iteration_bounds = array<i64: 2, 1>, scalar_prefetch = 0 : i64, scratch_operands = 2 : i64, tpu.core_type = #tpu.core_type<tc>, window_params = [{transform_indices = @transform_0, window_bounds = array<i64: 1, 8, 32>}, {transform_indices = @transform_1, window_bounds = array<i64: 1, 8, 32>}, {transform_indices = @transform_2, window_bounds = array<i64: 1, 8, 32>}, {pipeline_mode = #tpu.pipeline_mode<synchronous>, transform_indices = @transform_3, window_bounds = array<i64: 32, 64>}, {pipeline_mode = #tpu.pipeline_mode<synchronous>, transform_indices = @transform_4, window_bounds = array<i64: 1, 64>}, {pipeline_mode = #tpu.pipeline_mode<synchronous>, transform_indices = @transform_5, window_bounds = array<i64: 32, 64>}, {pipeline_mode = #tpu.pipeline_mode<synchronous>, transform_indices = @transform_6, window_bounds = array<i64: 1, 64>}, {pipeline_mode = #tpu.pipeline_mode<synchronous>, transform_indices = @transform_7, window_bounds = array<i64: 32, 64>}, {pipeline_mode = #tpu.pipeline_mode<synchronous>, transform_indices = @transform_8, window_bounds = array<i64: 1, 64>}, {pipeline_mode = #tpu.pipeline_mode<synchronous>, transform_indices = @transform_9, window_bounds = array<i64: 64, 32>}, {pipeline_mode = #tpu.pipeline_mode<synchronous>, transform_indices = @transform_10, window_bounds = array<i64: 1, 32>}, {transform_indices = @transform_11, window_bounds = array<i64: 1, 8, 32>}]} {
    %c0_i32 = arith.constant 0 : i32
    %0 = arith.cmpi eq, %arg1, %c0_i32 : i32
    %1 = arith.extui %0 : i1 to i32
    %c0_i32_0 = arith.constant 0 : i32
    %2 = arith.cmpi ne, %1, %c0_i32_0 : i32
    scf.if %2 {
      %c0_39 = arith.constant 0 : index
      %c0_40 = arith.constant 0 : index
      %c0_41 = arith.constant 0 : index
      %93 = vector.load %arg3[%c0_39, %c0_40, %c0_41] : memref<1x8x32xf32, #tpu.memory_space<vmem>>, vector<1x8x32xf32>
      %94 = vector.shape_cast %93 : vector<1x8x32xf32> to vector<8x32xf32>
      %c0_42 = arith.constant 0 : index
      %c0_43 = arith.constant 0 : index
      %c0_44 = arith.constant 0 : index
      %95 = vector.load %arg4[%c0_42, %c0_43, %c0_44] : memref<1x8x32xf32, #tpu.memory_space<vmem>>, vector<1x8x32xf32>
      %96 = vector.shape_cast %95 : vector<1x8x32xf32> to vector<8x32xf32>
      %c0_45 = arith.constant 0 : index
      %c0_46 = arith.constant 0 : index
      %97 = vector.load %arg7[%c0_45, %c0_46] : memref<32x64xf32, #tpu.memory_space<vmem>>, vector<32x64xf32>
      %cst_47 = arith.constant dense<0.000000e+00> : vector<8x64xf32>
      %98 = tpu.matmul %94, %97, %cst_47 {dimension_numbers = #tpu.dot_dimension_numbers<[1], [0], [0], [1], [0, 0, 1, 1], [], []>} : vector<8x32xf32>, vector<32x64xf32>, vector<8x64xf32> -> vector<8x64xf32>
      %c0_48 = arith.constant 0 : index
      %c0_49 = arith.constant 0 : index
      %99 = vector.load %arg8[%c0_48, %c0_49] : memref<1x64xf32, #tpu.memory_space<vmem>>, vector<1x64xf32>
      %100 = vector.shape_cast %99 : vector<1x64xf32> to vector<64xf32>
      %101 = vector.shape_cast %100 : vector<64xf32> to vector<1x64xf32>
      %102 = vector.broadcast %101 : vector<1x64xf32> to vector<8x64xf32>
      %103 = arith.addf %98, %102 : vector<8x64xf32>
      %c0_50 = arith.constant 0 : index
      %c0_51 = arith.constant 0 : index
      %104 = vector.load %arg14[%c0_50, %c0_51] : memref<8x64xf32, #tpu.memory_space<vmem>>, vector<8x64xf32>
      tpu.vector_store %arg14[%c0_50, %c0_51], %103 {strides = array<i32>} : memref<8x64xf32, #tpu.memory_space<vmem>>, vector<8x64xf32>,
      %c0_52 = arith.constant 0 : index
      %c0_53 = arith.constant 0 : index
      %105 = vector.load %arg9[%c0_52, %c0_53] : memref<32x64xf32, #tpu.memory_space<vmem>>, vector<32x64xf32>
      %cst_54 = arith.constant dense<0.000000e+00> : vector<8x64xf32>
      %106 = tpu.matmul %96, %105, %cst_54 {dimension_numbers = #tpu.dot_dimension_numbers<[1], [0], [0], [1], [0, 0, 1, 1], [], []>} : vector<8x32xf32>, vector<32x64xf32>, vector<8x64xf32> -> vector<8x64xf32>
      %c0_55 = arith.constant 0 : index
      %c0_56 = arith.constant 0 : index
      %107 = vector.load %arg10[%c0_55, %c0_56] : memref<1x64xf32, #tpu.memory_space<vmem>>, vector<1x64xf32>
      %108 = vector.shape_cast %107 : vector<1x64xf32> to vector<64xf32>
      %109 = vector.shape_cast %108 : vector<64xf32> to vector<1x64xf32>
      %110 = vector.broadcast %109 : vector<1x64xf32> to vector<8x64xf32>
      %111 = arith.addf %106, %110 : vector<8x64xf32>
      %c0_57 = arith.constant 0 : index
      %c0_58 = arith.constant 0 : index
      %112 = vector.load %arg15[%c0_57, %c0_58] : memref<8x64xf32, #tpu.memory_space<vmem>>, vector<8x64xf32>
      tpu.vector_store %arg15[%c0_57, %c0_58], %111 {strides = array<i32>} : memref<8x64xf32, #tpu.memory_space<vmem>>, vector<8x64xf32>,
    } else {
    }
    %c0 = arith.constant 0 : index
    %c0_1 = arith.constant 0 : index
    %c0_2 = arith.constant 0 : index
    %3 = vector.load %arg2[%c0, %c0_1, %c0_2] : memref<1x8x32xf32, #tpu.memory_space<vmem>>, vector<1x8x32xf32>
    %4 = vector.shape_cast %3 : vector<1x8x32xf32> to vector<8x32xf32>
    %c0_3 = arith.constant 0 : index
    %c0_4 = arith.constant 0 : index
    %5 = vector.load %arg5[%c0_3, %c0_4] : memref<32x64xf32, #tpu.memory_space<vmem>>, vector<32x64xf32>
    %cst = arith.constant dense<0.000000e+00> : vector<8x64xf32>
    %6 = tpu.matmul %4, %5, %cst {dimension_numbers = #tpu.dot_dimension_numbers<[1], [0], [0], [1], [0, 0, 1, 1], [], []>} : vector<8x32xf32>, vector<32x64xf32>, vector<8x64xf32> -> vector<8x64xf32>
    %c0_5 = arith.constant 0 : index
    %c0_6 = arith.constant 0 : index
    %7 = vector.load %arg6[%c0_5, %c0_6] : memref<1x64xf32, #tpu.memory_space<vmem>>, vector<1x64xf32>
    %8 = vector.shape_cast %7 : vector<1x64xf32> to vector<64xf32>
    %9 = vector.shape_cast %8 : vector<64xf32> to vector<1x64xf32>
    %10 = vector.broadcast %9 : vector<1x64xf32> to vector<8x64xf32>
    %11 = arith.addf %6, %10 : vector<8x64xf32>
    %c0_7 = arith.constant 0 : index
    %c0_8 = arith.constant 0 : index
    %12 = vector.load %arg14[%c0_7, %c0_8] : memref<8x64xf32, #tpu.memory_space<vmem>>, vector<8x64xf32>
    %c0_9 = arith.constant 0 : index
    %c0_10 = arith.constant 0 : index
    %13 = vector.load %arg15[%c0_9, %c0_10] : memref<8x64xf32, #tpu.memory_space<vmem>>, vector<8x64xf32>
    %14 = vector.extract_strided_slice %11 {offsets = [0, 0], sizes = [8, 16], strides = [1, 1]} : vector<8x64xf32> to vector<8x16xf32>
    %15 = vector.extract_strided_slice %12 {offsets = [0, 0], sizes = [8, 16], strides = [1, 1]} : vector<8x64xf32> to vector<8x16xf32>
    %16 = vector.extract_strided_slice %13 {offsets = [0, 0], sizes = [8, 16], strides = [1, 1]} : vector<8x64xf32> to vector<8x16xf32>
    %cst_11 = arith.constant dense<0.000000e+00> : vector<8x8xf32>
    %17 = tpu.matmul %14, %15, %cst_11 {dimension_numbers = #tpu.dot_dimension_numbers<[1], [1], [0], [0], [0, 0, 1, 0], [], []>} : vector<8x16xf32>, vector<8x16xf32>, vector<8x8xf32> -> vector<8x8xf32>
    %cst_12 = arith.constant 2.500000e-01 : f32
    %18 = vector.broadcast %cst_12 : f32 to vector<8x8xf32>
    %19 = arith.mulf %17, %18 : vector<8x8xf32>
    %cst_13 = arith.constant dense<0xFF800000> : vector<8xf32>
    %20 = vector.multi_reduction <maximumf>, %19, %cst_13 [1] : vector<8x8xf32> to vector<8xf32>
    %21 = vector.shape_cast %20 : vector<8xf32> to vector<8x1xf32>
    %22 = vector.broadcast %21 : vector<8x1xf32> to vector<8x8xf32>
    %23 = arith.subf %19, %22 : vector<8x8xf32>
    %24 = math.exp %23 : vector<8x8xf32>
    %cst_14 = arith.constant dense<0.000000e+00> : vector<8xf32>
    %25 = vector.multi_reduction <add>, %24, %cst_14 [1] : vector<8x8xf32> to vector<8xf32>
    %26 = vector.shape_cast %25 : vector<8xf32> to vector<8x1xf32>
    %cst_15 = arith.constant dense<0.000000e+00> : vector<8x16xf32>
    %27 = tpu.matmul %24, %16, %cst_15 {dimension_numbers = #tpu.dot_dimension_numbers<[1], [0], [0], [1], [0, 0, 1, 1], [], []>} : vector<8x8xf32>, vector<8x16xf32>, vector<8x16xf32> -> vector<8x16xf32>
    %28 = tpu.reciprocal %26 : vector<8x1xf32> -> vector<8x1xf32>
    %29 = vector.broadcast %28 : vector<8x1xf32> to vector<8x16xf32>
    %30 = arith.mulf %27, %29 : vector<8x16xf32>
    %31 = vector.extract_strided_slice %11 {offsets = [0, 16], sizes = [8, 16], strides = [1, 1]} : vector<8x64xf32> to vector<8x16xf32>
    %32 = vector.extract_strided_slice %12 {offsets = [0, 16], sizes = [8, 16], strides = [1, 1]} : vector<8x64xf32> to vector<8x16xf32>
    %33 = vector.extract_strided_slice %13 {offsets = [0, 16], sizes = [8, 16], strides = [1, 1]} : vector<8x64xf32> to vector<8x16xf32>
    %cst_16 = arith.constant dense<0.000000e+00> : vector<8x8xf32>
    %34 = tpu.matmul %31, %32, %cst_16 {dimension_numbers = #tpu.dot_dimension_numbers<[1], [1], [0], [0], [0, 0, 1, 0], [], []>} : vector<8x16xf32>, vector<8x16xf32>, vector<8x8xf32> -> vector<8x8xf32>
    %cst_17 = arith.constant 2.500000e-01 : f32
    %35 = vector.broadcast %cst_17 : f32 to vector<8x8xf32>
    %36 = arith.mulf %34, %35 : vector<8x8xf32>
    %cst_18 = arith.constant dense<0xFF800000> : vector<8xf32>
    %37 = vector.multi_reduction <maximumf>, %36, %cst_18 [1] : vector<8x8xf32> to vector<8xf32>
    %38 = vector.shape_cast %37 : vector<8xf32> to vector<8x1xf32>
    %39 = vector.broadcast %38 : vector<8x1xf32> to vector<8x8xf32>
    %40 = arith.subf %36, %39 : vector<8x8xf32>
    %41 = math.exp %40 : vector<8x8xf32>
    %cst_19 = arith.constant dense<0.000000e+00> : vector<8xf32>
    %42 = vector.multi_reduction <add>, %41, %cst_19 [1] : vector<8x8xf32> to vector<8xf32>
    %43 = vector.shape_cast %42 : vector<8xf32> to vector<8x1xf32>
    %cst_20 = arith.constant dense<0.000000e+00> : vector<8x16xf32>
    %44 = tpu.matmul %41, %33, %cst_20 {dimension_numbers = #tpu.dot_dimension_numbers<[1], [0], [0], [1], [0, 0, 1, 1], [], []>} : vector<8x8xf32>, vector<8x16xf32>, vector<8x16xf32> -> vector<8x16xf32>
    %45 = tpu.reciprocal %43 : vector<8x1xf32> -> vector<8x1xf32>
    %46 = vector.broadcast %45 : vector<8x1xf32> to vector<8x16xf32>
    %47 = arith.mulf %44, %46 : vector<8x16xf32>
    %48 = vector.extract_strided_slice %11 {offsets = [0, 32], sizes = [8, 16], strides = [1, 1]} : vector<8x64xf32> to vector<8x16xf32>
    %49 = vector.extract_strided_slice %12 {offsets = [0, 32], sizes = [8, 16], strides = [1, 1]} : vector<8x64xf32> to vector<8x16xf32>
    %50 = vector.extract_strided_slice %13 {offsets = [0, 32], sizes = [8, 16], strides = [1, 1]} : vector<8x64xf32> to vector<8x16xf32>
    %cst_21 = arith.constant dense<0.000000e+00> : vector<8x8xf32>
    %51 = tpu.matmul %48, %49, %cst_21 {dimension_numbers = #tpu.dot_dimension_numbers<[1], [1], [0], [0], [0, 0, 1, 0], [], []>} : vector<8x16xf32>, vector<8x16xf32>, vector<8x8xf32> -> vector<8x8xf32>
    %cst_22 = arith.constant 2.500000e-01 : f32
    %52 = vector.broadcast %cst_22 : f32 to vector<8x8xf32>
    %53 = arith.mulf %51, %52 : vector<8x8xf32>
    %cst_23 = arith.constant dense<0xFF800000> : vector<8xf32>
    %54 = vector.multi_reduction <maximumf>, %53, %cst_23 [1] : vector<8x8xf32> to vector<8xf32>
    %55 = vector.shape_cast %54 : vector<8xf32> to vector<8x1xf32>
    %56 = vector.broadcast %55 : vector<8x1xf32> to vector<8x8xf32>
    %57 = arith.subf %53, %56 : vector<8x8xf32>
    %58 = math.exp %57 : vector<8x8xf32>
    %cst_24 = arith.constant dense<0.000000e+00> : vector<8xf32>
    %59 = vector.multi_reduction <add>, %58, %cst_24 [1] : vector<8x8xf32> to vector<8xf32>
    %60 = vector.shape_cast %59 : vector<8xf32> to vector<8x1xf32>
    %cst_25 = arith.constant dense<0.000000e+00> : vector<8x16xf32>
    %61 = tpu.matmul %58, %50, %cst_25 {dimension_numbers = #tpu.dot_dimension_numbers<[1], [0], [0], [1], [0, 0, 1, 1], [], []>} : vector<8x8xf32>, vector<8x16xf32>, vector<8x16xf32> -> vector<8x16xf32>
    %62 = tpu.reciprocal %60 : vector<8x1xf32> -> vector<8x1xf32>
    %63 = vector.broadcast %62 : vector<8x1xf32> to vector<8x16xf32>
    %64 = arith.mulf %61, %63 : vector<8x16xf32>
    %65 = vector.extract_strided_slice %11 {offsets = [0, 48], sizes = [8, 16], strides = [1, 1]} : vector<8x64xf32> to vector<8x16xf32>
    %66 = vector.extract_strided_slice %12 {offsets = [0, 48], sizes = [8, 16], strides = [1, 1]} : vector<8x64xf32> to vector<8x16xf32>
    %67 = vector.extract_strided_slice %13 {offsets = [0, 48], sizes = [8, 16], strides = [1, 1]} : vector<8x64xf32> to vector<8x16xf32>
    %cst_26 = arith.constant dense<0.000000e+00> : vector<8x8xf32>
    %68 = tpu.matmul %65, %66, %cst_26 {dimension_numbers = #tpu.dot_dimension_numbers<[1], [1], [0], [0], [0, 0, 1, 0], [], []>} : vector<8x16xf32>, vector<8x16xf32>, vector<8x8xf32> -> vector<8x8xf32>
    %cst_27 = arith.constant 2.500000e-01 : f32
    %69 = vector.broadcast %cst_27 : f32 to vector<8x8xf32>
    %70 = arith.mulf %68, %69 : vector<8x8xf32>
    %cst_28 = arith.constant dense<0xFF800000> : vector<8xf32>
    %71 = vector.multi_reduction <maximumf>, %70, %cst_28 [1] : vector<8x8xf32> to vector<8xf32>
    %72 = vector.shape_cast %71 : vector<8xf32> to vector<8x1xf32>
    %73 = vector.broadcast %72 : vector<8x1xf32> to vector<8x8xf32>
    %74 = arith.subf %70, %73 : vector<8x8xf32>
    %75 = math.exp %74 : vector<8x8xf32>
    %cst_29 = arith.constant dense<0.000000e+00> : vector<8xf32>
    %76 = vector.multi_reduction <add>, %75, %cst_29 [1] : vector<8x8xf32> to vector<8xf32>
    %77 = vector.shape_cast %76 : vector<8xf32> to vector<8x1xf32>
    %cst_30 = arith.constant dense<0.000000e+00> : vector<8x16xf32>
    %78 = tpu.matmul %75, %67, %cst_30 {dimension_numbers = #tpu.dot_dimension_numbers<[1], [0], [0], [1], [0, 0, 1, 1], [], []>} : vector<8x8xf32>, vector<8x16xf32>, vector<8x16xf32> -> vector<8x16xf32>
    %79 = tpu.reciprocal %77 : vector<8x1xf32> -> vector<8x1xf32>
    %80 = vector.broadcast %79 : vector<8x1xf32> to vector<8x16xf32>
    %81 = arith.mulf %78, %80 : vector<8x16xf32>
    %82 = tpu.concatenate %30, %47, %64, %81 in 1 : vector<8x16xf32>, vector<8x16xf32>, vector<8x16xf32>, vector<8x16xf32> -> vector<8x64xf32>
    %c0_31 = arith.constant 0 : index
    %c0_32 = arith.constant 0 : index
    %83 = vector.load %arg11[%c0_31, %c0_32] : memref<64x32xf32, #tpu.memory_space<vmem>>, vector<64x32xf32>
    %cst_33 = arith.constant dense<0.000000e+00> : vector<8x32xf32>
    %84 = tpu.matmul %82, %83, %cst_33 {dimension_numbers = #tpu.dot_dimension_numbers<[1], [0], [0], [1], [0, 0, 1, 1], [], []>} : vector<8x64xf32>, vector<64x32xf32>, vector<8x32xf32> -> vector<8x32xf32>
    %c0_34 = arith.constant 0 : index
    %c0_35 = arith.constant 0 : index
    %85 = vector.load %arg12[%c0_34, %c0_35] : memref<1x32xf32, #tpu.memory_space<vmem>>, vector<1x32xf32>
    %86 = vector.shape_cast %85 : vector<1x32xf32> to vector<32xf32>
    %87 = vector.shape_cast %86 : vector<32xf32> to vector<1x32xf32>
    %88 = vector.broadcast %87 : vector<1x32xf32> to vector<8x32xf32>
    %89 = arith.addf %84, %88 : vector<8x32xf32>
    %c0_36 = arith.constant 0 : index
    %c0_37 = arith.constant 0 : index
    %c0_38 = arith.constant 0 : index
    %90 = vector.load %arg13[%c0_36, %c0_37, %c0_38] : memref<1x8x32xf32, #tpu.memory_space<vmem>>, vector<1x8x32xf32>
    %91 = vector.shape_cast %90 : vector<1x8x32xf32> to vector<8x32xf32>
    %92 = vector.shape_cast %89 : vector<8x32xf32> to vector<1x8x32xf32>
    tpu.vector_store %arg13[%c0_36, %c0_37, %c0_38], %92 {strides = array<i32>} : memref<1x8x32xf32, #tpu.memory_space<vmem>>, vector<1x8x32xf32>,
    return
  }
  func.func @transform_0(%arg0: i32, %arg1: i32) -> (i32, i32, i32) {
    %c0_i32 = arith.constant 0 : i32
    %c0_i32_0 = arith.constant 0 : i32
    return %arg0, %arg1, %c0_i32 : i32, i32, i32
  }
  func.func @transform_1(%arg0: i32, %arg1: i32) -> (i32, i32, i32) {
    %c0_i32 = arith.constant 0 : i32
    %c0_i32_0 = arith.constant 0 : i32
    %c0_i32_1 = arith.constant 0 : i32
    return %arg0, %c0_i32, %c0_i32_0 : i32, i32, i32
  }
  func.func @transform_2(%arg0: i32, %arg1: i32) -> (i32, i32, i32) {
    %c0_i32 = arith.constant 0 : i32
    %c0_i32_0 = arith.constant 0 : i32
    %c0_i32_1 = arith.constant 0 : i32
    return %arg0, %c0_i32, %c0_i32_0 : i32, i32, i32
  }
  func.func @transform_3(%arg0: i32, %arg1: i32) -> (i32, i32) {
    %c0_i32 = arith.constant 0 : i32
    %c0_i32_0 = arith.constant 0 : i32
    %c0_i32_1 = arith.constant 0 : i32
    return %c0_i32, %c0_i32_0 : i32, i32
  }
  func.func @transform_4(%arg0: i32, %arg1: i32) -> (i32, i32) {
    %c0_i32 = arith.constant 0 : i32
    %c0_i32_0 = arith.constant 0 : i32
    %c0_i32_1 = arith.constant 0 : i32
    return %c0_i32, %c0_i32_0 : i32, i32
  }
  func.func @transform_5(%arg0: i32, %arg1: i32) -> (i32, i32) {
    %c0_i32 = arith.constant 0 : i32
    %c0_i32_0 = arith.constant 0 : i32
    %c0_i32_1 = arith.constant 0 : i32
    return %c0_i32, %c0_i32_0 : i32, i32
  }
  func.func @transform_6(%arg0: i32, %arg1: i32) -> (i32, i32) {
    %c0_i32 = arith.constant 0 : i32
    %c0_i32_0 = arith.constant 0 : i32
    %c0_i32_1 = arith.constant 0 : i32
    return %c0_i32, %c0_i32_0 : i32, i32
  }
  func.func @transform_7(%arg0: i32, %arg1: i32) -> (i32, i32) {
    %c0_i32 = arith.constant 0 : i32
    %c0_i32_0 = arith.constant 0 : i32
    %c0_i32_1 = arith.constant 0 : i32
    return %c0_i32, %c0_i32_0 : i32, i32
  }
  func.func @transform_8(%arg0: i32, %arg1: i32) -> (i32, i32) {
    %c0_i32 = arith.constant 0 : i32
    %c0_i32_0 = arith.constant 0 : i32
    %c0_i32_1 = arith.constant 0 : i32
    return %c0_i32, %c0_i32_0 : i32, i32
  }
  func.func @transform_9(%arg0: i32, %arg1: i32) -> (i32, i32) {
    %c0_i32 = arith.constant 0 : i32
    %c0_i32_0 = arith.constant 0 : i32
    %c0_i32_1 = arith.constant 0 : i32
    return %c0_i32, %c0_i32_0 : i32, i32
  }
  func.func @transform_10(%arg0: i32, %arg1: i32) -> (i32, i32) {
    %c0_i32 = arith.constant 0 : i32
    %c0_i32_0 = arith.constant 0 : i32
    %c0_i32_1 = arith.constant 0 : i32
    return %c0_i32, %c0_i32_0 : i32, i32
  }
  func.func @transform_11(%arg0: i32, %arg1: i32) -> (i32, i32, i32) {
    %c0_i32 = arith.constant 0 : i32
    %c0_i32_0 = arith.constant 0 : i32
    return %arg0, %arg1, %c0_i32 : i32, i32, i32
  }
}

</mosaic_0001>

<llo_original>
// kernel: multi_head_attention.1
$region0: #{multi_head_attention.1}
  #allocation0 [shape = 'u32[]', space=smem, size = 0x4, offset = 0x4, fixed_abs, tag = 'smem constant byte address 0x4 - core index']
  #allocation1 [shape = 'u32[144,128]{1,0:T(1,128)}', space=vmem, size = 0x12000, scoped, tag = 'internal scratch']
  #allocation2 [shape = 'f32[8,64]{1,0:T(8,128)}', space=vmem, size = 0x1000, scoped, tag = 'scratch operand']
  #allocation3 [shape = 'f32[8,64]{1,0:T(8,128)}', space=vmem, size = 0x1000, scoped, tag = 'scratch operand']
  %s0 = inlined_call_operand.vmem [shape: f32[2,8,32], index: 0, kind: input, shape index: {}]
  %s1 = inlined_call_operand.vmem [shape: f32[2,8,32], index: 1, kind: input, shape index: {}]
  %s2 = inlined_call_operand.vmem [shape: f32[2,8,32], index: 2, kind: input, shape index: {}]
  %s3 = inlined_call_operand.vmem [shape: f32[32,64], index: 3, kind: input, shape index: {}]
  %s4 = inlined_call_operand.vmem [shape: f32[1,64], index: 4, kind: input, shape index: {}]
  %s5 = inlined_call_operand.vmem [shape: f32[32,64], index: 5, kind: input, shape index: {}]
  %s6 = inlined_call_operand.vmem [shape: f32[1,64], index: 6, kind: input, shape index: {}]
  %s7 = inlined_call_operand.vmem [shape: f32[32,64], index: 7, kind: input, shape index: {}]
  %s8 = inlined_call_operand.vmem [shape: f32[1,64], index: 8, kind: input, shape index: {}]
  %s9 = inlined_call_operand.vmem [shape: f32[64,32], index: 9, kind: input, shape index: {}]
  %s10 = inlined_call_operand.vmem [shape: f32[1,32], index: 10, kind: input, shape index: {}]
  %s11 = inlined_call_operand.hbm [shape: f32[2,8,32], index: 11, kind: output, shape index: {}]
  %s12 = sld [smem:[#allocation0]]
  $region81: #{multi_head_attention.1} parent=0
    _
  %s14 = ssub.s32 1, %s12
  %s15 = scalar_select 0, %s14, %s12
  $region1: #{multi_head_attention.1} parent=0
    #allocation4 [shape = 'u8[8192]{0}', space=vmem, size = 0x2000, scoped, tag = 'output window, operand 0']
    #allocation5 [shape = 's32[2]{0}', space=sflag, size = 0x8, scoped, tag = 'scoped memory for multi_head_attention.1']
    %16 = vsyncpa [#allocation5], 0
    %s17 = scalar_lea.sflag [#allocation5], 1
    %18 = vsyncpa %s17, 0
    loop: start=0, step=1, limit=4
    $region2: #{multi_head_attention.1} parent=1 // loop_pre_header
      _
    $region3: #{multi_head_attention.1} parent=1 // loop_header
      %s20 = sphi 0, %s24
      %p21 = scmp.ge.s32.totalorder %s20, 4
      %s27 = sphi 0, %s39
      %s28 = sphi 0, %s35
      %s29 = sphi 0, %s27
      %s30 = sphi 0, %s28
      %s31 = sphi 0, %s29
      %s32 = sphi 0, %s30
      %s44 = sphi 0, %s46
      %s47 = sphi 0, %s44
      %s48 = sphi 0, %s47
      %s64 = sphi 0, %s48
      %s70 = sphi 0, %s72
      %s73 = sphi 0, %s70
      %s74 = sphi 0, %s73
      %s90 = sphi 0, %s74
      %s96 = sphi 0, %s98
      %s99 = sphi 0, %s96
      %s100 = sphi 0, %s99
      %s116 = sphi 0, %s100
      %s120 = sphi 0, %s120
      %s122 = sphi 0, %s120
      %s123 = sphi 0, %s122
      %s137 = sphi 0, %s123
      %s141 = sphi 0, %s141
      %s143 = sphi 0, %s141
      %s144 = sphi 0, %s143
      %s158 = sphi 0, %s144
      %s162 = sphi 0, %s162
      %s164 = sphi 0, %s162
      %s165 = sphi 0, %s164
      %s179 = sphi 0, %s165
      %s183 = sphi 0, %s183
      %s185 = sphi 0, %s183
      %s186 = sphi 0, %s185
      %s200 = sphi 0, %s186
      %s204 = sphi 0, %s204
      %s206 = sphi 0, %s204
      %s207 = sphi 0, %s206
      %s221 = sphi 0, %s207
      %s225 = sphi 0, %s225
      %s227 = sphi 0, %s225
      %s228 = sphi 0, %s227
      %s242 = sphi 0, %s228
      %s246 = sphi 0, %s246
      %s248 = sphi 0, %s246
      %s249 = sphi 0, %s248
      %s263 = sphi 0, %s249
      %s267 = sphi 0, %s267
      %s269 = sphi 0, %s267
      %s270 = sphi 0, %s269
      %s284 = sphi 0, %s270
      %s292 = sphi 0, %s294
      %s295 = sphi 0, %s292
      %s296 = sphi 0, %s295
      %s312 = sphi 0, %s296
    $region4: #{multi_head_attention.1} parent=1 // loop_header_branch
      %23 = sbr.rel (%p21) target = $region8
    $region5: #{multi_head_attention.1} parent=1 // loop_body
      %s25 = ssub.s32 %s20, 1
      %s26 = ssub.s32 %s20, 2
      %s33 = sadd.s32 1, %s28
      %p34 = scmp.ge.s32.totalorder %s33, 1
      %s35 = scalar_select %p34, 0, %s33
      %s36 = sadd.s32 1, %s27
      %s37 = scalar_select %p34, %s36, %s27
      %p38 = scmp.ge.s32.totalorder %s37, 2
      %s39 = scalar_select %p38, 0, %s37
      %s40 = ssub.s32 %s27, %s39
      %s41 = ssub.s32 %s28, %s35
      %s42 = sor.u32 %s40, %s41
      %p43 = scmp.eq.s32.totalorder %s42, 0
      %s45 = sadd.s32 %s44, 1
      %s46 = scalar_select %p43, %s44, %s45
      %p49 = pneg %p43
      %p50 = scmp.eq.s32.totalorder %s20, 1
      %p51 = por %p49, %p50
      %p52 = scmp.ne.s32.totalorder %s44, %s47
      %p53 = scmp.eq.s32.totalorder %s20, 0
      %p54 = por %p52, %p53
      %p55 = scmp.ne.s32.totalorder %s44, %s47
      %p56 = scmp.eq.s32.totalorder %s25, 1
      %p57 = por %p55, %p56
      %p58 = scmp.ne.s32.totalorder %s47, %s48
      %p59 = scmp.eq.s32.totalorder %s25, 0
      %p60 = por %p58, %p59
      %p61 = scmp.ne.s32.totalorder %s47, %s48
      %p62 = scmp.eq.s32.totalorder %s26, 1
      %p63 = por %p61, %p62
      %p65 = scmp.ne.s32.totalorder %s48, %s64
      %p66 = scmp.eq.s32.totalorder %s26, 0
      %p67 = por %p65, %p66
      %s68 = ssub.s32 %s27, %s39
      %p69 = scmp.eq.s32.totalorder %s68, 0
      %s71 = sadd.s32 %s70, 1
      %s72 = scalar_select %p69, %s70, %s71
      %p75 = pneg %p69
      %p76 = scmp.eq.s32.totalorder %s20, 1
      %p77 = por %p75, %p76
      %p78 = scmp.ne.s32.totalorder %s70, %s73
      %p79 = scmp.eq.s32.totalorder %s20, 0
      %p80 = por %p78, %p79
      %p81 = scmp.ne.s32.totalorder %s70, %s73
      %p82 = scmp.eq.s32.totalorder %s25, 1
      %p83 = por %p81, %p82
      %p84 = scmp.ne.s32.totalorder %s73, %s74
      %p85 = scmp.eq.s32.totalorder %s25, 0
      %p86 = por %p84, %p85
      %p87 = scmp.ne.s32.totalorder %s73, %s74
      %p88 = scmp.eq.s32.totalorder %s26, 1
      %p89 = por %p87, %p88
      %p91 = scmp.ne.s32.totalorder %s74, %s90
      %p92 = scmp.eq.s32.totalorder %s26, 0
      %p93 = por %p91, %p92
      %s94 = ssub.s32 %s27, %s39
      %p95 = scmp.eq.s32.totalorder %s94, 0
      %s97 = sadd.s32 %s96, 1
      %s98 = scalar_select %p95, %s96, %s97
      %p101 = pneg %p95
      %p102 = scmp.eq.s32.totalorder %s20, 1
      %p103 = por %p101, %p102
      %p104 = scmp.ne.s32.totalorder %s96, %s99
      %p105 = scmp.eq.s32.totalorder %s20, 0
      %p106 = por %p104, %p105
      %p107 = scmp.ne.s32.totalorder %s96, %s99
      %p108 = scmp.eq.s32.totalorder %s25, 1
      %p109 = por %p107, %p108
      %p110 = scmp.ne.s32.totalorder %s99, %s100
      %p111 = scmp.eq.s32.totalorder %s25, 0
      %p112 = por %p110, %p111
      %p113 = scmp.ne.s32.totalorder %s99, %s100
      %p114 = scmp.eq.s32.totalorder %s26, 1
      %p115 = por %p113, %p114
      %p117 = scmp.ne.s32.totalorder %s100, %s116
      %p118 = scmp.eq.s32.totalorder %s26, 0
      %p119 = por %p117, %p118
      %s121 = sadd.s32 %s120, 1
      %p124 = scmp.eq.s32.totalorder %s20, 1
      %p125 = scmp.ne.s32.totalorder %s120, %s122
      %p126 = scmp.eq.s32.totalorder %s20, 0
      %p127 = por %p125, %p126
      %p128 = scmp.ne.s32.totalorder %s120, %s122
      %p129 = scmp.eq.s32.totalorder %s25, 1
      %p130 = por %p128, %p129
      %p131 = scmp.ne.s32.totalorder %s122, %s123
      %p132 = scmp.eq.s32.totalorder %s25, 0
      %p133 = por %p131, %p132
      %p134 = scmp.ne.s32.totalorder %s122, %s123
      %p135 = scmp.eq.s32.totalorder %s26, 1
      %p136 = por %p134, %p135
      %p138 = scmp.ne.s32.totalorder %s123, %s137
      %p139 = scmp.eq.s32.totalorder %s26, 0
      %p140 = por %p138, %p139
      %s142 = sadd.s32 %s141, 1
      %p145 = scmp.eq.s32.totalorder %s20, 1
      %p146 = scmp.ne.s32.totalorder %s141, %s143
      %p147 = scmp.eq.s32.totalorder %s20, 0
      %p148 = por %p146, %p147
      %p149 = scmp.ne.s32.totalorder %s141, %s143
      %p150 = scmp.eq.s32.totalorder %s25, 1
      %p151 = por %p149, %p150
      %p152 = scmp.ne.s32.totalorder %s143, %s144
      %p153 = scmp.eq.s32.totalorder %s25, 0
      %p154 = por %p152, %p153
      %p155 = scmp.ne.s32.totalorder %s143, %s144
      %p156 = scmp.eq.s32.totalorder %s26, 1
      %p157 = por %p155, %p156
      %p159 = scmp.ne.s32.totalorder %s144, %s158
      %p160 = scmp.eq.s32.totalorder %s26, 0
      %p161 = por %p159, %p160
      %s163 = sadd.s32 %s162, 1
      %p166 = scmp.eq.s32.totalorder %s20, 1
      %p167 = scmp.ne.s32.totalorder %s162, %s164
      %p168 = scmp.eq.s32.totalorder %s20, 0
      %p169 = por %p167, %p168
      %p170 = scmp.ne.s32.totalorder %s162, %s164
      %p171 = scmp.eq.s32.totalorder %s25, 1
      %p172 = por %p170, %p171
      %p173 = scmp.ne.s32.totalorder %s164, %s165
      %p174 = scmp.eq.s32.totalorder %s25, 0
      %p175 = por %p173, %p174
      %p176 = scmp.ne.s32.totalorder %s164, %s165
      %p177 = scmp.eq.s32.totalorder %s26, 1
      %p178 = por %p176, %p177
      %p180 = scmp.ne.s32.totalorder %s165, %s179
      %p181 = scmp.eq.s32.totalorder %s26, 0
      %p182 = por %p180, %p181
      %s184 = sadd.s32 %s183, 1
      %p187 = scmp.eq.s32.totalorder %s20, 1
      %p188 = scmp.ne.s32.totalorder %s183, %s185
      %p189 = scmp.eq.s32.totalorder %s20, 0
      %p190 = por %p188, %p189
      %p191 = scmp.ne.s32.totalorder %s183, %s185
      %p192 = scmp.eq.s32.totalorder %s25, 1
      %p193 = por %p191, %p192
      %p194 = scmp.ne.s32.totalorder %s185, %s186
      %p195 = scmp.eq.s32.totalorder %s25, 0
      %p196 = por %p194, %p195
      %p197 = scmp.ne.s32.totalorder %s185, %s186
      %p198 = scmp.eq.s32.totalorder %s26, 1
      %p199 = por %p197, %p198
      %p201 = scmp.ne.s32.totalorder %s186, %s200
      %p202 = scmp.eq.s32.totalorder %s26, 0
      %p203 = por %p201, %p202
      %s205 = sadd.s32 %s204, 1
      %p208 = scmp.eq.s32.totalorder %s20, 1
      %p209 = scmp.ne.s32.totalorder %s204, %s206
      %p210 = scmp.eq.s32.totalorder %s20, 0
      %p211 = por %p209, %p210
      %p212 = scmp.ne.s32.totalorder %s204, %s206
      %p213 = scmp.eq.s32.totalorder %s25, 1
      %p214 = por %p212, %p213
      %p215 = scmp.ne.s32.totalorder %s206, %s207
      %p216 = scmp.eq.s32.totalorder %s25, 0
      %p217 = por %p215, %p216
      %p218 = scmp.ne.s32.totalorder %s206, %s207
      %p219 = scmp.eq.s32.totalorder %s26, 1
      %p220 = por %p218, %p219
      %p222 = scmp.ne.s32.totalorder %s207, %s221
      %p223 = scmp.eq.s32.totalorder %s26, 0
      %p224 = por %p222, %p223
      %s226 = sadd.s32 %s225, 1
      %p229 = scmp.eq.s32.totalorder %s20, 1
      %p230 = scmp.ne.s32.totalorder %s225, %s227
      %p231 = scmp.eq.s32.totalorder %s20, 0
      %p232 = por %p230, %p231
      %p233 = scmp.ne.s32.totalorder %s225, %s227
      %p234 = scmp.eq.s32.totalorder %s25, 1
      %p235 = por %p233, %p234
      %p236 = scmp.ne.s32.totalorder %s227, %s228
      %p237 = scmp.eq.s32.totalorder %s25, 0
      %p238 = por %p236, %p237
      %p239 = scmp.ne.s32.totalorder %s227, %s228
      %p240 = scmp.eq.s32.totalorder %s26, 1
      %p241 = por %p239, %p240
      %p243 = scmp.ne.s32.totalorder %s228, %s242
      %p244 = scmp.eq.s32.totalorder %s26, 0
      %p245 = por %p243, %p244
      %s247 = sadd.s32 %s246, 1
      %p250 = scmp.eq.s32.totalorder %s20, 1
      %p251 = scmp.ne.s32.totalorder %s246, %s248
      %p252 = scmp.eq.s32.totalorder %s20, 0
      %p253 = por %p251, %p252
      %p254 = scmp.ne.s32.totalorder %s246, %s248
      %p255 = scmp.eq.s32.totalorder %s25, 1
      %p256 = por %p254, %p255
      %p257 = scmp.ne.s32.totalorder %s248, %s249
      %p258 = scmp.eq.s32.totalorder %s25, 0
      %p259 = por %p257, %p258
      %p260 = scmp.ne.s32.totalorder %s248, %s249
      %p261 = scmp.eq.s32.totalorder %s26, 1
      %p262 = por %p260, %p261
      %p264 = scmp.ne.s32.totalorder %s249, %s263
      %p265 = scmp.eq.s32.totalorder %s26, 0
      %p266 = por %p264, %p265
      %s268 = sadd.s32 %s267, 1
      %p271 = scmp.eq.s32.totalorder %s20, 1
      %p272 = scmp.ne.s32.totalorder %s267, %s269
      %p273 = scmp.eq.s32.totalorder %s20, 0
      %p274 = por %p272, %p273
      %p275 = scmp.ne.s32.totalorder %s267, %s269
      %p276 = scmp.eq.s32.totalorder %s25, 1
      %p277 = por %p275, %p276
      %p278 = scmp.ne.s32.totalorder %s269, %s270
      %p279 = scmp.eq.s32.totalorder %s25, 0
      %p280 = por %p278, %p279
      %p281 = scmp.ne.s32.totalorder %s269, %s270
      %p282 = scmp.eq.s32.totalorder %s26, 1
      %p283 = por %p281, %p282
      %p285 = scmp.ne.s32.totalorder %s270, %s284
      %p286 = scmp.eq.s32.totalorder %s26, 0
      %p287 = por %p285, %p286
      %s288 = ssub.s32 %s27, %s39
      %s289 = ssub.s32 %s28, %s35
      %s290 = sor.u32 %s288, %s289
      %p291 = scmp.eq.s32.totalorder %s290, 0
      %s293 = sadd.s32 %s292, 1
      %s294 = scalar_select %p291, %s292, %s293
      %p297 = pneg %p291
      %p298 = scmp.eq.s32.totalorder %s20, 1
      %p299 = por %p297, %p298
      %p300 = scmp.ne.s32.totalorder %s292, %s295
      %p301 = scmp.eq.s32.totalorder %s20, 0
      %p302 = por %p300, %p301
      %p303 = scmp.ne.s32.totalorder %s292, %s295
      %p304 = scmp.eq.s32.totalorder %s25, 1
      %p305 = por %p303, %p304
      %p306 = scmp.ne.s32.totalorder %s295, %s296
      %p307 = scmp.eq.s32.totalorder %s25, 0
      %p308 = por %p306, %p307
      %p309 = scmp.ne.s32.totalorder %s295, %s296
      %p310 = scmp.eq.s32.totalorder %s26, 1
      %p311 = por %p309, %p310
      %p313 = scmp.ne.s32.totalorder %s296, %s312
      %p314 = scmp.eq.s32.totalorder %s26, 0
      %p315 = por %p313, %p314
      %p316 = scmp.le.s32.totalorder 1, %s20
      %p317 = scmp.lt.s32.totalorder %s20, 3
      %p318 = pnand %p316, %p317
      %p319 = pneg %p318
      // Predicated region
      $region9: #{multi_head_attention.1} parent=5 // pred_check
        _
      $region10: #{multi_head_attention.1} parent=5 // pred_check_branch
        %321 = sbr.rel (%p318) target = $region12
      $region11: #{multi_head_attention.1} parent=5 // pred_region
        %s322 = ssub.s32 %s20, 1
        // Predicated region
        $region13: #{multi_head_attention.1} parent=11 // pred_check
          %p323 = pneg %p133
        $region14: #{multi_head_attention.1} parent=11 // pred_check_branch
          %325 = sbr.rel (%p323) target = $region16
        $region15: #{multi_head_attention.1} parent=11 // pred_region
          _
        $region16: #{multi_head_attention.1} parent=11 // pred_fallthru
          _
        // Predicated region
        $region17: #{multi_head_attention.1} parent=11 // pred_check
          %p326 = pneg %p154
        $region18: #{multi_head_attention.1} parent=11 // pred_check_branch
          %328 = sbr.rel (%p326) target = $region20
        $region19: #{multi_head_attention.1} parent=11 // pred_region
          _
        $region20: #{multi_head_attention.1} parent=11 // pred_fallthru
          _
        // Predicated region
        $region21: #{multi_head_attention.1} parent=11 // pred_check
          %p329 = pneg %p175
        $region22: #{multi_head_attention.1} parent=11 // pred_check_branch
          %331 = sbr.rel (%p329) target = $region24
        $region23: #{multi_head_attention.1} parent=11 // pred_region
          _
        $region24: #{multi_head_attention.1} parent=11 // pred_fallthru
          _
        // Predicated region
        $region25: #{multi_head_attention.1} parent=11 // pred_check
          %p332 = pneg %p196
        $region26: #{multi_head_attention.1} parent=11 // pred_check_branch
          %334 = sbr.rel (%p332) target = $region28
        $region27: #{multi_head_attention.1} parent=11 // pred_region
          _
        $region28: #{multi_head_attention.1} parent=11 // pred_fallthru
          _
        // Predicated region
        $region29: #{multi_head_attention.1} parent=11 // pred_check
          %p335 = pneg %p217
        $region30: #{multi_head_attention.1} parent=11 // pred_check_branch
          %337 = sbr.rel (%p335) target = $region32
        $region31: #{multi_head_attention.1} parent=11 // pred_region
          _
        $region32: #{multi_head_attention.1} parent=11 // pred_fallthru
          _
        // Predicated region
        $region33: #{multi_head_attention.1} parent=11 // pred_check
          %p338 = pneg %p238
        $region34: #{multi_head_attention.1} parent=11 // pred_check_branch
          %340 = sbr.rel (%p338) target = $region36
        $region35: #{multi_head_attention.1} parent=11 // pred_region
          _
        $region36: #{multi_head_attention.1} parent=11 // pred_fallthru
          _
        // Predicated region
        $region37: #{multi_head_attention.1} parent=11 // pred_check
          %p341 = pneg %p259
        $region38: #{multi_head_attention.1} parent=11 // pred_check_branch
          %343 = sbr.rel (%p341) target = $region40
        $region39: #{multi_head_attention.1} parent=11 // pred_region
          _
        $region40: #{multi_head_attention.1} parent=11 // pred_fallthru
          _
        // Predicated region
        $region41: #{multi_head_attention.1} parent=11 // pred_check
          %p344 = pneg %p280
        $region42: #{multi_head_attention.1} parent=11 // pred_check_branch
          %346 = sbr.rel (%p344) target = $region44
        $region43: #{multi_head_attention.1} parent=11 // pred_region
          _
        $region44: #{multi_head_attention.1} parent=11 // pred_fallthru
          _
      $region12: #{multi_head_attention.1} parent=5 // pred_fallthru
        _
      %p347 = scmp.lt.s32.totalorder %s20, 2
      // Predicated region
      $region45: #{multi_head_attention.1} parent=5 // pred_check
        %p348 = pneg %p347
      $region46: #{multi_head_attention.1} parent=5 // pred_check_branch
        %350 = sbr.rel (%p348) target = $region48
      $region47: #{multi_head_attention.1} parent=5 // pred_region
        // Predicated region
        $region49: #{multi_head_attention.1} parent=47 // pred_check
          %p351 = pneg %p54
        $region50: #{multi_head_attention.1} parent=47 // pred_check_branch
          %353 = sbr.rel (%p351) target = $region52
        $region51: #{multi_head_attention.1} parent=47 // pred_region
          %p354 = scmp.lt.s32.totalorder %s27, 1
          %s355 = scalar_select %p354, %s27, 1
          %p356 = scmp.lt.s32.totalorder %s28, 0
          %s357 = scalar_select %p356, %s28, 0
          %s358 = sadd.s32 %s357, %s355
          %s359 = smul.addr %s358, 8
          %s360 = scalar_lea.vmem %s0, %s359
        $region52: #{multi_head_attention.1} parent=47 // pred_fallthru
          _
        // Predicated region
        $region53: #{multi_head_attention.1} parent=47 // pred_check
          %p361 = pneg %p80
        $region54: #{multi_head_attention.1} parent=47 // pred_check_branch
          %363 = sbr.rel (%p361) target = $region56
        $region55: #{multi_head_attention.1} parent=47 // pred_region
          %p364 = scmp.lt.s32.totalorder %s27, 1
          %s365 = scalar_select %p364, %s27, 1
          %s366 = smul.addr %s365, 8
          %s367 = scalar_lea.vmem %s1, %s366
        $region56: #{multi_head_attention.1} parent=47 // pred_fallthru
          _
        // Predicated region
        $region57: #{multi_head_attention.1} parent=47 // pred_check
          %p368 = pneg %p106
        $region58: #{multi_head_attention.1} parent=47 // pred_check_branch
          %370 = sbr.rel (%p368) target = $region60
        $region59: #{multi_head_attention.1} parent=47 // pred_region
          %p371 = scmp.lt.s32.totalorder %s27, 1
          %s372 = scalar_select %p371, %s27, 1
          %s373 = smul.addr %s372, 8
          %s374 = scalar_lea.vmem %s2, %s373
        $region60: #{multi_head_attention.1} parent=47 // pred_fallthru
          _
      $region48: #{multi_head_attention.1} parent=5 // pred_fallthru
        _
      %p375 = scmp.le.s32.totalorder 1, %s20
      %p376 = scmp.lt.s32.totalorder %s20, 3
      %p377 = pnand %p375, %p376
      %p378 = pneg %p377
      // Predicated region
      $region61: #{multi_head_attention.1} parent=5 // pred_check
        _
      $region62: #{multi_head_attention.1} parent=5 // pred_check_branch
        %380 = sbr.rel (%p377) target = $region64
      $region63: #{multi_head_attention.1} parent=5 // pred_region
        %s381 = ssub.s32 %s20, 1
        %p382 = scmp.lt.s32.totalorder %s29, 1
        %s383 = scalar_select %p382, %s29, 1
        %p384 = scmp.lt.s32.totalorder %s30, 0
        %s385 = scalar_select %p384, %s30, 0
        %s386 = sadd.s32 %s385, %s383
        %s387 = smul.addr %s386, 8
        %s388 = scalar_lea.vmem %s0, %s387
        %p389 = pneg %p60
        %p390 = pneg %p57
        %p391 = scmp.lt.s32.totalorder %s29, 1
        %s392 = scalar_select %p391, %s29, 1
        %s393 = smul.addr %s392, 8
        %s394 = scalar_lea.vmem %s1, %s393
        %p395 = pneg %p86
        %p396 = pneg %p83
        %p397 = scmp.lt.s32.totalorder %s29, 1
        %s398 = scalar_select %p397, %s29, 1
        %s399 = smul.addr %s398, 8
        %s400 = scalar_lea.vmem %s2, %s399
        %p401 = pneg %p112
        %p402 = pneg %p109
        %p403 = pneg %p133
        %p404 = pneg %p130
        %p405 = pneg %p154
        %p406 = pneg %p151
        %p407 = pneg %p175
        %p408 = pneg %p172
        %p409 = pneg %p196
        %p410 = pneg %p193
        %p411 = pneg %p217
        %p412 = pneg %p214
        %p413 = pneg %p238
        %p414 = pneg %p235
        %p415 = pneg %p259
        %p416 = pneg %p256
        %p417 = pneg %p280
        %p418 = pneg %p277
        %p419 = pneg %p308
        %p420 = pneg %p305
        %s421 = sand.u32 %s295, 1
        %s422 = scalar_lea.sflag [#allocation5], %s421
        %s423 = sand.u32 %s295, 1
        %s424 = smul.addr %s423, 8
        %s425 = scalar_lea.vmem [#allocation4], %s424
        %p426 = scmp.lt.s32.totalorder %s29, 1
        %s427 = scalar_select %p426, %s29, 1
        %p428 = scmp.lt.s32.totalorder %s30, 0
        %s429 = scalar_select %p428, %s30, 0
        %s430 = sadd.s32 %s429, %s427
        %s431 = smul.addr %s430, 8
        %s432 = scalar_lea.vmem %s0, %s431
        %p433 = scmp.lt.s32.totalorder %s29, 1
        %s434 = scalar_select %p433, %s29, 1
        %s435 = smul.addr %s434, 8
        %s436 = scalar_lea.vmem %s1, %s435
        %p437 = scmp.lt.s32.totalorder %s29, 1
        %s438 = scalar_select %p437, %s29, 1
        %s439 = smul.addr %s438, 8
        %s440 = scalar_lea.vmem %s2, %s439
        %p441 = scmp.eq.s32.totalorder %s30, 0
        // Predicated region
        $region65: #{multi_head_attention.1} parent=63 // pred_check
          %p442 = pneg %p441
        $region66: #{multi_head_attention.1} parent=63 // pred_check_branch
          %444 = sbr.rel (%p442) target = $region68
        $region67: #{multi_head_attention.1} parent=63 // pred_region
          %v445 = vld [vmem:[%s436] sm:$0xff]
          %v446 = vld [vmem:[%s440] sm:$0xff]
          %v447 = vld [vmem:[%s5] sm:$0xff]
          %v448 = vld [vmem:[%s5 + $0x8] sm:$0xff]
          %v449 = vld [vmem:[%s5 + $0x10] sm:$0xff]
          %v450 = vld [vmem:[%s5 + $0x18] sm:$0xff]
          %v451 = vld [vmem:[%s6] sm:$0x1]
          %v453 = vlaneseq
          %v454 = vshrl.u32 %v453, 7
          %v455 = vsub.s32 0, %v454
          %v456 = vrot.slane %v451, %v455
          %vm458 = vcmask 261120
          %v460 = vsel %vm458, %v445, 0
          %462 = vmatprep.subr.mxu0 0.0
          %463 = vmatpush1.msra.mxu0 %v447
          %464 = vmatprep.subr.mxu0 0.0
          %465 = vmatpush1.msra.mxu0 %v448
          %466 = vmatprep.subr.mxu0 0.0
          %467 = vmatpush1.msra.mxu0 %v449
          %468 = vmatprep.subr.mxu0 0.0
          %469 = vmatpush1.msra.mxu0 %v450
          %470 = vmatprep.subr.mxu0 0.0
          %471 = vmatpush1.msra.mxu0 0.0
          %472 = vmatprep.subr.mxu0 0.0
          %473 = vmatpush1.msra.mxu0 0.0
          %474 = vmatprep.subr.mxu0 0.0
          %475 = vmatpush1.msra.mxu0 0.0
          %476 = vmatprep.subr.mxu0 0.0
          %477 = vmatpush1.msra.mxu0 0.0
          %478 = vmatprep.subr.mxu0 0.0
          %479 = vmatpush1.msra.mxu0 0.0
          %480 = vmatprep.subr.mxu0 0.0
          %481 = vmatpush1.msra.mxu0 0.0
          %482 = vmatprep.subr.mxu0 0.0
          %483 = vmatpush1.msra.mxu0 0.0
          %484 = vmatprep.subr.mxu0 0.0
          %485 = vmatpush1.msra.mxu0 0.0
          %486 = vmatprep.subr.mxu0 0.0
          %487 = vmatpush1.msra.mxu0 0.0
          %488 = vmatprep.subr.mxu0 0.0
          %489 = vmatpush1.msra.mxu0 0.0
          %490 = vmatprep.subr.mxu0 0.0
          %491 = vmatpush1.msra.mxu0 0.0
          %492 = vmatprep.subr.mxu0 0.0
          %493 = vmatpush1.msra.mxu0 0.0
          %494 = vmatprep.subr.mxu0 0.0
          %495 = vmatpush1.msra.mxu0 0.0
          %496 = vmatprep.subr.mxu0 0.0
          %497 = vmatpush1.msra.mxu0 0.0
          %498 = vmatprep.subr.mxu0 0.0
          %499 = vmatpush1.msra.mxu0 0.0
          %500 = vmatprep.subr.mxu0 0.0
          %501 = vmatpush1.msra.mxu0 0.0
          %502 = vmatprep.subr.mxu0 0.0
          %503 = vmatpush1.msra.mxu0 0.0
          %504 = vmatprep.subr.mxu0 0.0
          %505 = vmatpush1.msra.mxu0 0.0
          %506 = vmatprep.subr.mxu0 0.0
          %507 = vmatpush1.msra.mxu0 0.0
          %508 = vmatprep.subr.mxu0 0.0
          %509 = vmatpush1.msra.mxu0 0.0
          %510 = vmatprep.subr.mxu0 0.0
          %511 = vmatpush1.msra.mxu0 0.0
          %512 = vmatprep.subr.mxu0 0.0
          %513 = vmatpush1.msra.mxu0 0.0
          %514 = vmatprep.subr.mxu0 0.0
          %515 = vmatpush1.msra.mxu0 0.0
          %516 = vmatprep.subr.mxu0 0.0
          %517 = vmatpush1.msra.mxu0 0.0
          %518 = vmatprep.subr.mxu0 0.0
          %519 = vmatpush1.msra.mxu0 0.0
          %520 = vmatprep.subr.mxu0 0.0
          %521 = vmatpush1.msra.mxu0 0.0
          %522 = vmatprep.subr.mxu0 0.0
          %523 = vmatpush1.msra.mxu0 0.0
          %524 = vmatprep.subr.mxu0 0.0
          %525 = vmatpush1.msra.mxu0 0.0
          %526 = vmatprep.mubr.f32.mxu0 0.0
          %527 = vmatmul.mubr.f32.gmra.mrb[0].mxu0 %v460
          %v528 = vpop.f32.mrb[0].mxu0
          %v529 = vadd.f32 %v456, %v528
          %v530 = vpop.f32.mrb[0].mxu0
          %531 = vdwg.mxu0
          %vm532 = vcmask 523264
          %533 = vst.msk [vmem:[#allocation2] sm:$0xff] %vm532, %v529
          %v534 = vld [vmem:[%s7] sm:$0xff]
          %v535 = vld [vmem:[%s7 + $0x8] sm:$0xff]
          %v536 = vld [vmem:[%s7 + $0x10] sm:$0xff]
          %v537 = vld [vmem:[%s7 + $0x18] sm:$0xff]
          %v538 = vld [vmem:[%s8] sm:$0x1]
          %v540 = vlaneseq
          %v541 = vshrl.u32 %v540, 7
          %v542 = vsub.s32 0, %v541
          %v543 = vrot.slane %v538, %v542
          %v546 = vsel %vm458, %v446, 0
          %548 = vmatprep.subr.mxu0 0.0
          %549 = vmatpush1.msra.mxu0 %v534
          %550 = vmatprep.subr.mxu0 0.0
          %551 = vmatpush1.msra.mxu0 %v535
          %552 = vmatprep.subr.mxu0 0.0
          %553 = vmatpush1.msra.mxu0 %v536
          %554 = vmatprep.subr.mxu0 0.0
          %555 = vmatpush1.msra.mxu0 %v537
          %556 = vmatprep.subr.mxu0 0.0
          %557 = vmatpush1.msra.mxu0 0.0
          %558 = vmatprep.subr.mxu0 0.0
          %559 = vmatpush1.msra.mxu0 0.0
          %560 = vmatprep.subr.mxu0 0.0
          %561 = vmatpush1.msra.mxu0 0.0
          %562 = vmatprep.subr.mxu0 0.0
          %563 = vmatpush1.msra.mxu0 0.0
          %564 = vmatprep.subr.mxu0 0.0
          %565 = vmatpush1.msra.mxu0 0.0
          %566 = vmatprep.subr.mxu0 0.0
          %567 = vmatpush1.msra.mxu0 0.0
          %568 = vmatprep.subr.mxu0 0.0
          %569 = vmatpush1.msra.mxu0 0.0
          %570 = vmatprep.subr.mxu0 0.0
          %571 = vmatpush1.msra.mxu0 0.0
          %572 = vmatprep.subr.mxu0 0.0
          %573 = vmatpush1.msra.mxu0 0.0
          %574 = vmatprep.subr.mxu0 0.0
          %575 = vmatpush1.msra.mxu0 0.0
          %576 = vmatprep.subr.mxu0 0.0
          %577 = vmatpush1.msra.mxu0 0.0
          %578 = vmatprep.subr.mxu0 0.0
          %579 = vmatpush1.msra.mxu0 0.0
          %580 = vmatprep.subr.mxu0 0.0
          %581 = vmatpush1.msra.mxu0 0.0
          %582 = vmatprep.subr.mxu0 0.0
          %583 = vmatpush1.msra.mxu0 0.0
          %584 = vmatprep.subr.mxu0 0.0
          %585 = vmatpush1.msra.mxu0 0.0
          %586 = vmatprep.subr.mxu0 0.0
          %587 = vmatpush1.msra.mxu0 0.0
          %588 = vmatprep.subr.mxu0 0.0
          %589 = vmatpush1.msra.mxu0 0.0
          %590 = vmatprep.subr.mxu0 0.0
          %591 = vmatpush1.msra.mxu0 0.0
          %592 = vmatprep.subr.mxu0 0.0
          %593 = vmatpush1.msra.mxu0 0.0
          %594 = vmatprep.subr.mxu0 0.0
          %595 = vmatpush1.msra.mxu0 0.0
          %596 = vmatprep.subr.mxu0 0.0
          %597 = vmatpush1.msra.mxu0 0.0
          %598 = vmatprep.subr.mxu0 0.0
          %599 = vmatpush1.msra.mxu0 0.0
          %600 = vmatprep.subr.mxu0 0.0
          %601 = vmatpush1.msra.mxu0 0.0
          %602 = vmatprep.subr.mxu0 0.0
          %603 = vmatpush1.msra.mxu0 0.0
          %604 = vmatprep.subr.mxu0 0.0
          %605 = vmatpush1.msra.mxu0 0.0
          %606 = vmatprep.subr.mxu0 0.0
          %607 = vmatpush1.msra.mxu0 0.0
          %608 = vmatprep.subr.mxu0 0.0
          %609 = vmatpush1.msra.mxu0 0.0
          %610 = vmatprep.subr.mxu0 0.0
          %611 = vmatpush1.msra.mxu0 0.0
          %612 = vmatprep.mubr.f32.mxu0 0.0
          %613 = vmatmul.mubr.f32.gmra.mrb[0].mxu0 %v546
          %v614 = vpop.f32.mrb[0].mxu0
          %v615 = vadd.f32 %v543, %v614
          %v616 = vpop.f32.mrb[0].mxu0
          %617 = vdwg.mxu0
          %618 = vst.msk [vmem:[#allocation3] sm:$0xff] %vm532, %v615
        $region68: #{multi_head_attention.1} parent=63 // pred_fallthru
          _
        %v619 = vld [vmem:[%s432] sm:$0xff]
        %v620 = vld [vmem:[%s3] sm:$0xff]
        %v621 = vld [vmem:[%s3 + $0x8] sm:$0xff]
        %v622 = vld [vmem:[%s3 + $0x10] sm:$0xff]
        %v623 = vld [vmem:[%s3 + $0x18] sm:$0xff]
        %v624 = vld [vmem:[%s4] sm:$0x1]
        %v626 = vlaneseq
        %v627 = vshrl.u32 %v626, 7
        %v628 = vsub.s32 0, %v627
        %v629 = vrot.slane %v624, %v628
        %vm631 = vcmask 261120
        %v633 = vsel %vm631, %v619, 0
        %635 = vmatprep.subr.mxu0 0.0
        %636 = vmatpush1.msra.mxu0 %v620
        %637 = vmatprep.subr.mxu0 0.0
        %638 = vmatpush1.msra.mxu0 %v621
        %639 = vmatprep.subr.mxu0 0.0
        %640 = vmatpush1.msra.mxu0 %v622
        %641 = vmatprep.subr.mxu0 0.0
        %642 = vmatpush1.msra.mxu0 %v623
        %643 = vmatprep.subr.mxu0 0.0
        %644 = vmatpush1.msra.mxu0 0.0
        %645 = vmatprep.subr.mxu0 0.0
        %646 = vmatpush1.msra.mxu0 0.0
        %647 = vmatprep.subr.mxu0 0.0
        %648 = vmatpush1.msra.mxu0 0.0
        %649 = vmatprep.subr.mxu0 0.0
        %650 = vmatpush1.msra.mxu0 0.0
        %651 = vmatprep.subr.mxu0 0.0
        %652 = vmatpush1.msra.mxu0 0.0
        %653 = vmatprep.subr.mxu0 0.0
        %654 = vmatpush1.msra.mxu0 0.0
        %655 = vmatprep.subr.mxu0 0.0
        %656 = vmatpush1.msra.mxu0 0.0
        %657 = vmatprep.subr.mxu0 0.0
        %658 = vmatpush1.msra.mxu0 0.0
        %659 = vmatprep.subr.mxu0 0.0
        %660 = vmatpush1.msra.mxu0 0.0
        %661 = vmatprep.subr.mxu0 0.0
        %662 = vmatpush1.msra.mxu0 0.0
        %663 = vmatprep.subr.mxu0 0.0
        %664 = vmatpush1.msra.mxu0 0.0
        %665 = vmatprep.subr.mxu0 0.0
        %666 = vmatpush1.msra.mxu0 0.0
        %667 = vmatprep.subr.mxu0 0.0
        %668 = vmatpush1.msra.mxu0 0.0
        %669 = vmatprep.subr.mxu0 0.0
        %670 = vmatpush1.msra.mxu0 0.0
        %671 = vmatprep.subr.mxu0 0.0
        %672 = vmatpush1.msra.mxu0 0.0
        %673 = vmatprep.subr.mxu0 0.0
        %674 = vmatpush1.msra.mxu0 0.0
        %675 = vmatprep.subr.mxu0 0.0
        %676 = vmatpush1.msra.mxu0 0.0
        %677 = vmatprep.subr.mxu0 0.0
        %678 = vmatpush1.msra.mxu0 0.0
        %679 = vmatprep.subr.mxu0 0.0
        %680 = vmatpush1.msra.mxu0 0.0
        %681 = vmatprep.subr.mxu0 0.0
        %682 = vmatpush1.msra.mxu0 0.0
        %683 = vmatprep.subr.mxu0 0.0
        %684 = vmatpush1.msra.mxu0 0.0
        %685 = vmatprep.subr.mxu0 0.0
        %686 = vmatpush1.msra.mxu0 0.0
        %687 = vmatprep.subr.mxu0 0.0
        %688 = vmatpush1.msra.mxu0 0.0
        %689 = vmatprep.subr.mxu0 0.0
        %690 = vmatpush1.msra.mxu0 0.0
        %691 = vmatprep.subr.mxu0 0.0
        %692 = vmatpush1.msra.mxu0 0.0
        %693 = vmatprep.subr.mxu0 0.0
        %694 = vmatpush1.msra.mxu0 0.0
        %695 = vmatprep.subr.mxu0 0.0
        %696 = vmatpush1.msra.mxu0 0.0
        %697 = vmatprep.subr.mxu0 0.0
        %698 = vmatpush1.msra.mxu0 0.0
        %699 = vmatprep.mubr.f32.mxu0 0.0
        %700 = vmatmul.mubr.f32.gmra.mrb[0].mxu0 %v633
        %v701 = vpop.f32.mrb[0].mxu0
        %v702 = vadd.f32 %v629, %v701
        %v703 = vpop.f32.mrb[0].mxu0
        %704 = vdwg.mxu0
        %v705 = vld [vmem:[#allocation2] sm:$0xff]
        %v706 = vld [vmem:[#allocation3] sm:$0xff]
        %vm707 = vcmask 130048
        %v709 = vsel %vm707, %v702, 0
        %v712 = vsel %vm707, %v705, 0
        %714 = vmatprep.subr.mxu0 0.0
        %715 = vmatpush1.xpose.msra.mxu0 %v712
        %716 = vmatprep.subr.mxu0 0.0
        %717 = vmatpush1.xpose.msra.mxu0 0.0
        %718 = vmatprep.subr.mxu0 0.0
        %719 = vmatpush1.xpose.msra.mxu0 0.0
        %720 = vmatprep.subr.mxu0 0.0
        %721 = vmatpush1.xpose.msra.mxu0 0.0
        %722 = vmatprep.subr.mxu0 0.0
        %723 = vmatpush1.xpose.msra.mxu0 0.0
        %724 = vmatprep.subr.mxu0 0.0
        %725 = vmatpush1.xpose.msra.mxu0 0.0
        %726 = vmatprep.subr.mxu0 0.0
        %727 = vmatpush1.xpose.msra.mxu0 0.0
        %728 = vmatprep.subr.mxu0 0.0
        %729 = vmatpush1.xpose.msra.mxu0 0.0
        %730 = vmatprep.subr.mxu0 0.0
        %731 = vmatpush1.xpose.msra.mxu0 0.0
        %732 = vmatprep.subr.mxu0 0.0
        %733 = vmatpush1.xpose.msra.mxu0 0.0
        %734 = vmatprep.subr.mxu0 0.0
        %735 = vmatpush1.xpose.msra.mxu0 0.0
        %736 = vmatprep.subr.mxu0 0.0
        %737 = vmatpush1.xpose.msra.mxu0 0.0
        %738 = vmatprep.subr.mxu0 0.0
        %739 = vmatpush1.xpose.msra.mxu0 0.0
        %740 = vmatprep.subr.mxu0 0.0
        %741 = vmatpush1.xpose.msra.mxu0 0.0
        %742 = vmatprep.subr.mxu0 0.0
        %743 = vmatpush1.xpose.msra.mxu0 0.0
        %744 = vmatprep.subr.mxu0 0.0
        %745 = vmatpush1.xpose.msra.mxu0 0.0
        %746 = vmatprep.subr.mxu0 0.0
        %747 = vmatpush1.xpose.msra.mxu0 0.0
        %748 = vmatprep.subr.mxu0 0.0
        %749 = vmatpush1.xpose.msra.mxu0 0.0
        %750 = vmatprep.subr.mxu0 0.0
        %751 = vmatpush1.xpose.msra.mxu0 0.0
        %752 = vmatprep.subr.mxu0 0.0
        %753 = vmatpush1.xpose.msra.mxu0 0.0
        %754 = vmatprep.subr.mxu0 0.0
        %755 = vmatpush1.xpose.msra.mxu0 0.0
        %756 = vmatprep.subr.mxu0 0.0
        %757 = vmatpush1.xpose.msra.mxu0 0.0
        %758 = vmatprep.subr.mxu0 0.0
        %759 = vmatpush1.xpose.msra.mxu0 0.0
        %760 = vmatprep.subr.mxu0 0.0
        %761 = vmatpush1.xpose.msra.mxu0 0.0
        %762 = vmatprep.subr.mxu0 0.0
        %763 = vmatpush1.xpose.msra.mxu0 0.0
        %764 = vmatprep.subr.mxu0 0.0
        %765 = vmatpush1.xpose.msra.mxu0 0.0
        %766 = vmatprep.subr.mxu0 0.0
        %767 = vmatpush1.xpose.msra.mxu0 0.0
        %768 = vmatprep.subr.mxu0 0.0
        %769 = vmatpush1.xpose.msra.mxu0 0.0
        %770 = vmatprep.subr.mxu0 0.0
        %771 = vmatpush1.xpose.msra.mxu0 0.0
        %772 = vmatprep.subr.mxu0 0.0
        %773 = vmatpush1.xpose.msra.mxu0 0.0
        %774 = vmatprep.subr.mxu0 0.0
        %775 = vmatpush1.xpose.msra.mxu0 0.0
        %776 = vmatprep.subr.mxu0 0.0
        %777 = vmatpush1.xpose.msra.mxu0 0.0
        %778 = vmatprep.mubr.f32.mxu0 0.0
        %779 = vmatmul.mubr.f32.gmra.mrb[0].mxu0 %v709
        %v780 = vpop.f32.mrb[0].mxu0
        %v781 = vadd.f32 0.0, %v780
        %v782 = vpop.f32.mrb[0].mxu0
        %783 = vdwg.mxu0
        %v784 = vmul.f32 %v781, 0.25
        %vm785 = vcmask 64512
        %v786 = vsel %vm785, %v784, -inf
        %787 = vmax.xlane.f32.xlu0 %v786
        %v788 = vpop.xlane.xlu0 %787
        %v789 = vsub.f32 %v784, %v788
        %v790 = vmul.f32 %v789, 1.442695
        %v791 = vpow.pop %v790
        %v792 = vsel %vm785, %v791, 0.0
        %793 = vadd.xlane.f32.xlu0 %v792
        %v794 = vpop.xlane.xlu0 %793
        %v796 = vsel %vm785, %v791, 0
        %798 = vmatprep.subr.mxu0 0.0
        %799 = vmatpush1.msra.mxu0 %v706
        %800 = vmatprep.subr.mxu0 0.0
        %801 = vmatpush1.msra.mxu0 0.0
        %802 = vmatprep.subr.mxu0 0.0
        %803 = vmatpush1.msra.mxu0 0.0
        %804 = vmatprep.subr.mxu0 0.0
        %805 = vmatpush1.msra.mxu0 0.0
        %806 = vmatprep.subr.mxu0 0.0
        %807 = vmatpush1.msra.mxu0 0.0
        %808 = vmatprep.subr.mxu0 0.0
        %809 = vmatpush1.msra.mxu0 0.0
        %810 = vmatprep.subr.mxu0 0.0
        %811 = vmatpush1.msra.mxu0 0.0
        %812 = vmatprep.subr.mxu0 0.0
        %813 = vmatpush1.msra.mxu0 0.0
        %814 = vmatprep.subr.mxu0 0.0
        %815 = vmatpush1.msra.mxu0 0.0
        %816 = vmatprep.subr.mxu0 0.0
        %817 = vmatpush1.msra.mxu0 0.0
        %818 = vmatprep.subr.mxu0 0.0
        %819 = vmatpush1.msra.mxu0 0.0
        %820 = vmatprep.subr.mxu0 0.0
        %821 = vmatpush1.msra.mxu0 0.0
        %822 = vmatprep.subr.mxu0 0.0
        %823 = vmatpush1.msra.mxu0 0.0
        %824 = vmatprep.subr.mxu0 0.0
        %825 = vmatpush1.msra.mxu0 0.0
        %826 = vmatprep.subr.mxu0 0.0
        %827 = vmatpush1.msra.mxu0 0.0
        %828 = vmatprep.subr.mxu0 0.0
        %829 = vmatpush1.msra.mxu0 0.0
        %830 = vmatprep.subr.mxu0 0.0
        %831 = vmatpush1.msra.mxu0 0.0
        %832 = vmatprep.subr.mxu0 0.0
        %833 = vmatpush1.msra.mxu0 0.0
        %834 = vmatprep.subr.mxu0 0.0
        %835 = vmatpush1.msra.mxu0 0.0
        %836 = vmatprep.subr.mxu0 0.0
        %837 = vmatpush1.msra.mxu0 0.0
        %838 = vmatprep.subr.mxu0 0.0
        %839 = vmatpush1.msra.mxu0 0.0
        %840 = vmatprep.subr.mxu0 0.0
        %841 = vmatpush1.msra.mxu0 0.0
        %842 = vmatprep.subr.mxu0 0.0
        %843 = vmatpush1.msra.mxu0 0.0
        %844 = vmatprep.subr.mxu0 0.0
        %845 = vmatpush1.msra.mxu0 0.0
        %846 = vmatprep.subr.mxu0 0.0
        %847 = vmatpush1.msra.mxu0 0.0
        %848 = vmatprep.subr.mxu0 0.0
        %849 = vmatpush1.msra.mxu0 0.0
        %850 = vmatprep.subr.mxu0 0.0
        %851 = vmatpush1.msra.mxu0 0.0
        %852 = vmatprep.subr.mxu0 0.0
        %853 = vmatpush1.msra.mxu0 0.0
        %854 = vmatprep.subr.mxu0 0.0
        %855 = vmatpush1.msra.mxu0 0.0
        %856 = vmatprep.subr.mxu0 0.0
        %857 = vmatpush1.msra.mxu0 0.0
        %858 = vmatprep.subr.mxu0 0.0
        %859 = vmatpush1.msra.mxu0 0.0
        %860 = vmatprep.subr.mxu0 0.0
        %861 = vmatpush1.msra.mxu0 0.0
        %862 = vmatprep.mubr.f32.mxu0 0.0
        %863 = vmatmul.mubr.f32.gmra.mrb[0].mxu0 %v796
        %v864 = vpop.f32.mrb[0].mxu0
        %v865 = vadd.f32 0.0, %v864
        %v866 = vpop.f32.mrb[0].mxu0
        %867 = vdwg.mxu0
        %v868 = vrcp.pop %v794
        %v869 = vmul.f32 %v865, %v868
        %870 = vrot.lane.b32.xlu0 %v702, 112
        %v871 = vpop.permute.xlu0 %870
        %872 = vrot.lane.b32.xlu0 %v705, 112
        %v873 = vpop.permute.xlu0 %872
        %v874 = vsel %vm707, %v871, 0
        %v876 = vsel %vm707, %v873, 0
        %878 = vmatprep.subr.mxu0 0.0
        %879 = vmatpush1.xpose.msra.mxu0 %v876
        %880 = vmatprep.subr.mxu0 0.0
        %881 = vmatpush1.xpose.msra.mxu0 0.0
        %882 = vmatprep.subr.mxu0 0.0
        %883 = vmatpush1.xpose.msra.mxu0 0.0
        %884 = vmatprep.subr.mxu0 0.0
        %885 = vmatpush1.xpose.msra.mxu0 0.0
        %886 = vmatprep.subr.mxu0 0.0
        %887 = vmatpush1.xpose.msra.mxu0 0.0
        %888 = vmatprep.subr.mxu0 0.0
        %889 = vmatpush1.xpose.msra.mxu0 0.0
        %890 = vmatprep.subr.mxu0 0.0
        %891 = vmatpush1.xpose.msra.mxu0 0.0
        %892 = vmatprep.subr.mxu0 0.0
        %893 = vmatpush1.xpose.msra.mxu0 0.0
        %894 = vmatprep.subr.mxu0 0.0
        %895 = vmatpush1.xpose.msra.mxu0 0.0
        %896 = vmatprep.subr.mxu0 0.0
        %897 = vmatpush1.xpose.msra.mxu0 0.0
        %898 = vmatprep.subr.mxu0 0.0
        %899 = vmatpush1.xpose.msra.mxu0 0.0
        %900 = vmatprep.subr.mxu0 0.0
        %901 = vmatpush1.xpose.msra.mxu0 0.0
        %902 = vmatprep.subr.mxu0 0.0
        %903 = vmatpush1.xpose.msra.mxu0 0.0
        %904 = vmatprep.subr.mxu0 0.0
        %905 = vmatpush1.xpose.msra.mxu0 0.0
        %906 = vmatprep.subr.mxu0 0.0
        %907 = vmatpush1.xpose.msra.mxu0 0.0
        %908 = vmatprep.subr.mxu0 0.0
        %909 = vmatpush1.xpose.msra.mxu0 0.0
        %910 = vmatprep.subr.mxu0 0.0
        %911 = vmatpush1.xpose.msra.mxu0 0.0
        %912 = vmatprep.subr.mxu0 0.0
        %913 = vmatpush1.xpose.msra.mxu0 0.0
        %914 = vmatprep.subr.mxu0 0.0
        %915 = vmatpush1.xpose.msra.mxu0 0.0
        %916 = vmatprep.subr.mxu0 0.0
        %917 = vmatpush1.xpose.msra.mxu0 0.0
        %918 = vmatprep.subr.mxu0 0.0
        %919 = vmatpush1.xpose.msra.mxu0 0.0
        %920 = vmatprep.subr.mxu0 0.0
        %921 = vmatpush1.xpose.msra.mxu0 0.0
        %922 = vmatprep.subr.mxu0 0.0
        %923 = vmatpush1.xpose.msra.mxu0 0.0
        %924 = vmatprep.subr.mxu0 0.0
        %925 = vmatpush1.xpose.msra.mxu0 0.0
        %926 = vmatprep.subr.mxu0 0.0
        %927 = vmatpush1.xpose.msra.mxu0 0.0
        %928 = vmatprep.subr.mxu0 0.0
        %929 = vmatpush1.xpose.msra.mxu0 0.0
        %930 = vmatprep.subr.mxu0 0.0
        %931 = vmatpush1.xpose.msra.mxu0 0.0
        %932 = vmatprep.subr.mxu0 0.0
        %933 = vmatpush1.xpose.msra.mxu0 0.0
        %934 = vmatprep.subr.mxu0 0.0
        %935 = vmatpush1.xpose.msra.mxu0 0.0
        %936 = vmatprep.subr.mxu0 0.0
        %937 = vmatpush1.xpose.msra.mxu0 0.0
        %938 = vmatprep.subr.mxu0 0.0
        %939 = vmatpush1.xpose.msra.mxu0 0.0
        %940 = vmatprep.subr.mxu0 0.0
        %941 = vmatpush1.xpose.msra.mxu0 0.0
        %942 = vmatprep.mubr.f32.mxu0 0.0
        %943 = vmatmul.mubr.f32.gmra.mrb[0].mxu0 %v874
        %v944 = vpop.f32.mrb[0].mxu0
        %v945 = vadd.f32 0.0, %v944
        %v946 = vpop.f32.mrb[0].mxu0
        %947 = vdwg.mxu0
        %v948 = vmul.f32 %v945, 0.25
        %v949 = vsel %vm785, %v948, -inf
        %950 = vmax.xlane.f32.xlu0 %v949
        %v951 = vpop.xlane.xlu0 %950
        %v952 = vsub.f32 %v948, %v951
        %v953 = vmul.f32 %v952, 1.442695
        %v954 = vpow.pop %v953
        %v955 = vsel %vm785, %v954, 0.0
        %956 = vadd.xlane.f32.xlu0 %v955
        %v957 = vpop.xlane.xlu0 %956
        %959 = vrot.lane.b32.xlu0 %v706, 112
        %v960 = vpop.permute.xlu0 %959
        %v963 = vsel %vm785, %v954, 0
        %965 = vmatprep.subr.mxu0 0.0
        %966 = vmatpush1.msra.mxu0 %v960
        %967 = vmatprep.subr.mxu0 0.0
        %968 = vmatpush1.msra.mxu0 0.0
        %969 = vmatprep.subr.mxu0 0.0
        %970 = vmatpush1.msra.mxu0 0.0
        %971 = vmatprep.subr.mxu0 0.0
        %972 = vmatpush1.msra.mxu0 0.0
        %973 = vmatprep.subr.mxu0 0.0
        %974 = vmatpush1.msra.mxu0 0.0
        %975 = vmatprep.subr.mxu0 0.0
        %976 = vmatpush1.msra.mxu0 0.0
        %977 = vmatprep.subr.mxu0 0.0
        %978 = vmatpush1.msra.mxu0 0.0
        %979 = vmatprep.subr.mxu0 0.0
        %980 = vmatpush1.msra.mxu0 0.0
        %981 = vmatprep.subr.mxu0 0.0
        %982 = vmatpush1.msra.mxu0 0.0
        %983 = vmatprep.subr.mxu0 0.0
        %984 = vmatpush1.msra.mxu0 0.0
        %985 = vmatprep.subr.mxu0 0.0
        %986 = vmatpush1.msra.mxu0 0.0
        %987 = vmatprep.subr.mxu0 0.0
        %988 = vmatpush1.msra.mxu0 0.0
        %989 = vmatprep.subr.mxu0 0.0
        %990 = vmatpush1.msra.mxu0 0.0
        %991 = vmatprep.subr.mxu0 0.0
        %992 = vmatpush1.msra.mxu0 0.0
        %993 = vmatprep.subr.mxu0 0.0
        %994 = vmatpush1.msra.mxu0 0.0
        %995 = vmatprep.subr.mxu0 0.0
        %996 = vmatpush1.msra.mxu0 0.0
        %997 = vmatprep.subr.mxu0 0.0
        %998 = vmatpush1.msra.mxu0 0.0
        %999 = vmatprep.subr.mxu0 0.0
        %1000 = vmatpush1.msra.mxu0 0.0
        %1001 = vmatprep.subr.mxu0 0.0
        %1002 = vmatpush1.msra.mxu0 0.0
        %1003 = vmatprep.subr.mxu0 0.0
        %1004 = vmatpush1.msra.mxu0 0.0
        %1005 = vmatprep.subr.mxu0 0.0
        %1006 = vmatpush1.msra.mxu0 0.0
        %1007 = vmatprep.subr.mxu0 0.0
        %1008 = vmatpush1.msra.mxu0 0.0
        %1009 = vmatprep.subr.mxu0 0.0
        %1010 = vmatpush1.msra.mxu0 0.0
        %1011 = vmatprep.subr.mxu0 0.0
        %1012 = vmatpush1.msra.mxu0 0.0
        %1013 = vmatprep.subr.mxu0 0.0
        %1014 = vmatpush1.msra.mxu0 0.0
        %1015 = vmatprep.subr.mxu0 0.0
        %1016 = vmatpush1.msra.mxu0 0.0
        %1017 = vmatprep.subr.mxu0 0.0
        %1018 = vmatpush1.msra.mxu0 0.0
        %1019 = vmatprep.subr.mxu0 0.0
        %1020 = vmatpush1.msra.mxu0 0.0
        %1021 = vmatprep.subr.mxu0 0.0
        %1022 = vmatpush1.msra.mxu0 0.0
        %1023 = vmatprep.subr.mxu0 0.0
        %1024 = vmatpush1.msra.mxu0 0.0
        %1025 = vmatprep.subr.mxu0 0.0
        %1026 = vmatpush1.msra.mxu0 0.0
        %1027 = vmatprep.subr.mxu0 0.0
        %1028 = vmatpush1.msra.mxu0 0.0
        %1029 = vmatprep.mubr.f32.mxu0 0.0
        %1030 = vmatmul.mubr.f32.gmra.mrb[0].mxu0 %v963
        %v1031 = vpop.f32.mrb[0].mxu0
        %v1032 = vadd.f32 0.0, %v1031
        %v1033 = vpop.f32.mrb[0].mxu0
        %1034 = vdwg.mxu0
        %v1035 = vrcp.pop %v957
        %v1036 = vmul.f32 %v1032, %v1035
        %1037 = vrot.lane.b32.xlu0 %v702, 96
        %v1038 = vpop.permute.xlu0 %1037
        %1039 = vrot.lane.b32.xlu0 %v705, 96
        %v1040 = vpop.permute.xlu0 %1039
        %v1041 = vsel %vm707, %v1038, 0
        %v1043 = vsel %vm707, %v1040, 0
        %1045 = vmatprep.subr.mxu0 0.0
        %1046 = vmatpush1.xpose.msra.mxu0 %v1043
        %1047 = vmatprep.subr.mxu0 0.0
        %1048 = vmatpush1.xpose.msra.mxu0 0.0
        %1049 = vmatprep.subr.mxu0 0.0
        %1050 = vmatpush1.xpose.msra.mxu0 0.0
        %1051 = vmatprep.subr.mxu0 0.0
        %1052 = vmatpush1.xpose.msra.mxu0 0.0
        %1053 = vmatprep.subr.mxu0 0.0
        %1054 = vmatpush1.xpose.msra.mxu0 0.0
        %1055 = vmatprep.subr.mxu0 0.0
        %1056 = vmatpush1.xpose.msra.mxu0 0.0
        %1057 = vmatprep.subr.mxu0 0.0
        %1058 = vmatpush1.xpose.msra.mxu0 0.0
        %1059 = vmatprep.subr.mxu0 0.0
        %1060 = vmatpush1.xpose.msra.mxu0 0.0
        %1061 = vmatprep.subr.mxu0 0.0
        %1062 = vmatpush1.xpose.msra.mxu0 0.0
        %1063 = vmatprep.subr.mxu0 0.0
        %1064 = vmatpush1.xpose.msra.mxu0 0.0
        %1065 = vmatprep.subr.mxu0 0.0
        %1066 = vmatpush1.xpose.msra.mxu0 0.0
        %1067 = vmatprep.subr.mxu0 0.0
        %1068 = vmatpush1.xpose.msra.mxu0 0.0
        %1069 = vmatprep.subr.mxu0 0.0
        %1070 = vmatpush1.xpose.msra.mxu0 0.0
        %1071 = vmatprep.subr.mxu0 0.0
        %1072 = vmatpush1.xpose.msra.mxu0 0.0
        %1073 = vmatprep.subr.mxu0 0.0
        %1074 = vmatpush1.xpose.msra.mxu0 0.0
        %1075 = vmatprep.subr.mxu0 0.0
        %1076 = vmatpush1.xpose.msra.mxu0 0.0
        %1077 = vmatprep.subr.mxu0 0.0
        %1078 = vmatpush1.xpose.msra.mxu0 0.0
        %1079 = vmatprep.subr.mxu0 0.0
        %1080 = vmatpush1.xpose.msra.mxu0 0.0
        %1081 = vmatprep.subr.mxu0 0.0
        %1082 = vmatpush1.xpose.msra.mxu0 0.0
        %1083 = vmatprep.subr.mxu0 0.0
        %1084 = vmatpush1.xpose.msra.mxu0 0.0
        %1085 = vmatprep.subr.mxu0 0.0
        %1086 = vmatpush1.xpose.msra.mxu0 0.0
        %1087 = vmatprep.subr.mxu0 0.0
        %1088 = vmatpush1.xpose.msra.mxu0 0.0
        %1089 = vmatprep.subr.mxu0 0.0
        %1090 = vmatpush1.xpose.msra.mxu0 0.0
        %1091 = vmatprep.subr.mxu0 0.0
        %1092 = vmatpush1.xpose.msra.mxu0 0.0
        %1093 = vmatprep.subr.mxu0 0.0
        %1094 = vmatpush1.xpose.msra.mxu0 0.0
        %1095 = vmatprep.subr.mxu0 0.0
        %1096 = vmatpush1.xpose.msra.mxu0 0.0
        %1097 = vmatprep.subr.mxu0 0.0
        %1098 = vmatpush1.xpose.msra.mxu0 0.0
        %1099 = vmatprep.subr.mxu0 0.0
        %1100 = vmatpush1.xpose.msra.mxu0 0.0
        %1101 = vmatprep.subr.mxu0 0.0
        %1102 = vmatpush1.xpose.msra.mxu0 0.0
        %1103 = vmatprep.subr.mxu0 0.0
        %1104 = vmatpush1.xpose.msra.mxu0 0.0
        %1105 = vmatprep.subr.mxu0 0.0
        %1106 = vmatpush1.xpose.msra.mxu0 0.0
        %1107 = vmatprep.subr.mxu0 0.0
        %1108 = vmatpush1.xpose.msra.mxu0 0.0
        %1109 = vmatprep.mubr.f32.mxu0 0.0
        %1110 = vmatmul.mubr.f32.gmra.mrb[0].mxu0 %v1041
        %v1111 = vpop.f32.mrb[0].mxu0
        %v1112 = vadd.f32 0.0, %v1111
        %v1113 = vpop.f32.mrb[0].mxu0
        %1114 = vdwg.mxu0
        %v1115 = vmul.f32 %v1112, 0.25
        %v1116 = vsel %vm785, %v1115, -inf
        %1117 = vmax.xlane.f32.xlu0 %v1116
        %v1118 = vpop.xlane.xlu0 %1117
        %v1119 = vsub.f32 %v1115, %v1118
        %v1120 = vmul.f32 %v1119, 1.442695
        %v1121 = vpow.pop %v1120
        %v1122 = vsel %vm785, %v1121, 0.0
        %1123 = vadd.xlane.f32.xlu0 %v1122
        %v1124 = vpop.xlane.xlu0 %1123
        %1125 = vrot.lane.b32.xlu0 %v706, 96
        %v1126 = vpop.permute.xlu0 %1125
        %v1129 = vsel %vm785, %v1121, 0
        %1131 = vmatprep.subr.mxu0 0.0
        %1132 = vmatpush1.msra.mxu0 %v1126
        %1133 = vmatprep.subr.mxu0 0.0
        %1134 = vmatpush1.msra.mxu0 0.0
        %1135 = vmatprep.subr.mxu0 0.0
        %1136 = vmatpush1.msra.mxu0 0.0
        %1137 = vmatprep.subr.mxu0 0.0
        %1138 = vmatpush1.msra.mxu0 0.0
        %1139 = vmatprep.subr.mxu0 0.0
        %1140 = vmatpush1.msra.mxu0 0.0
        %1141 = vmatprep.subr.mxu0 0.0
        %1142 = vmatpush1.msra.mxu0 0.0
        %1143 = vmatprep.subr.mxu0 0.0
        %1144 = vmatpush1.msra.mxu0 0.0
        %1145 = vmatprep.subr.mxu0 0.0
        %1146 = vmatpush1.msra.mxu0 0.0
        %1147 = vmatprep.subr.mxu0 0.0
        %1148 = vmatpush1.msra.mxu0 0.0
        %1149 = vmatprep.subr.mxu0 0.0
        %1150 = vmatpush1.msra.mxu0 0.0
        %1151 = vmatprep.subr.mxu0 0.0
        %1152 = vmatpush1.msra.mxu0 0.0
        %1153 = vmatprep.subr.mxu0 0.0
        %1154 = vmatpush1.msra.mxu0 0.0
        %1155 = vmatprep.subr.mxu0 0.0
        %1156 = vmatpush1.msra.mxu0 0.0
        %1157 = vmatprep.subr.mxu0 0.0
        %1158 = vmatpush1.msra.mxu0 0.0
        %1159 = vmatprep.subr.mxu0 0.0
        %1160 = vmatpush1.msra.mxu0 0.0
        %1161 = vmatprep.subr.mxu0 0.0
        %1162 = vmatpush1.msra.mxu0 0.0
        %1163 = vmatprep.subr.mxu0 0.0
        %1164 = vmatpush1.msra.mxu0 0.0
        %1165 = vmatprep.subr.mxu0 0.0
        %1166 = vmatpush1.msra.mxu0 0.0
        %1167 = vmatprep.subr.mxu0 0.0
        %1168 = vmatpush1.msra.mxu0 0.0
        %1169 = vmatprep.subr.mxu0 0.0
        %1170 = vmatpush1.msra.mxu0 0.0
        %1171 = vmatprep.subr.mxu0 0.0
        %1172 = vmatpush1.msra.mxu0 0.0
        %1173 = vmatprep.subr.mxu0 0.0
        %1174 = vmatpush1.msra.mxu0 0.0
        %1175 = vmatprep.subr.mxu0 0.0
        %1176 = vmatpush1.msra.mxu0 0.0
        %1177 = vmatprep.subr.mxu0 0.0
        %1178 = vmatpush1.msra.mxu0 0.0
        %1179 = vmatprep.subr.mxu0 0.0
        %1180 = vmatpush1.msra.mxu0 0.0
        %1181 = vmatprep.subr.mxu0 0.0
        %1182 = vmatpush1.msra.mxu0 0.0
        %1183 = vmatprep.subr.mxu0 0.0
        %1184 = vmatpush1.msra.mxu0 0.0
        %1185 = vmatprep.subr.mxu0 0.0
        %1186 = vmatpush1.msra.mxu0 0.0
        %1187 = vmatprep.subr.mxu0 0.0
        %1188 = vmatpush1.msra.mxu0 0.0
        %1189 = vmatprep.subr.mxu0 0.0
        %1190 = vmatpush1.msra.mxu0 0.0
        %1191 = vmatprep.subr.mxu0 0.0
        %1192 = vmatpush1.msra.mxu0 0.0
        %1193 = vmatprep.subr.mxu0 0.0
        %1194 = vmatpush1.msra.mxu0 0.0
        %1195 = vmatprep.mubr.f32.mxu0 0.0
        %1196 = vmatmul.mubr.f32.gmra.mrb[0].mxu0 %v1129
        %v1197 = vpop.f32.mrb[0].mxu0
        %v1198 = vadd.f32 0.0, %v1197
        %v1199 = vpop.f32.mrb[0].mxu0
        %1200 = vdwg.mxu0
        %v1201 = vrcp.pop %v1124
        %v1202 = vmul.f32 %v1198, %v1201
        %1203 = vrot.lane.b32.xlu0 %v702, 80
        %v1204 = vpop.permute.xlu0 %1203
        %1205 = vrot.lane.b32.xlu0 %v705, 80
        %v1206 = vpop.permute.xlu0 %1205
        %v1207 = vsel %vm707, %v1204, 0
        %v1209 = vsel %vm707, %v1206, 0
        %1211 = vmatprep.subr.mxu0 0.0
        %1212 = vmatpush1.xpose.msra.mxu0 %v1209
        %1213 = vmatprep.subr.mxu0 0.0
        %1214 = vmatpush1.xpose.msra.mxu0 0.0
        %1215 = vmatprep.subr.mxu0 0.0
        %1216 = vmatpush1.xpose.msra.mxu0 0.0
        %1217 = vmatprep.subr.mxu0 0.0
        %1218 = vmatpush1.xpose.msra.mxu0 0.0
        %1219 = vmatprep.subr.mxu0 0.0
        %1220 = vmatpush1.xpose.msra.mxu0 0.0
        %1221 = vmatprep.subr.mxu0 0.0
        %1222 = vmatpush1.xpose.msra.mxu0 0.0
        %1223 = vmatprep.subr.mxu0 0.0
        %1224 = vmatpush1.xpose.msra.mxu0 0.0
        %1225 = vmatprep.subr.mxu0 0.0
        %1226 = vmatpush1.xpose.msra.mxu0 0.0
        %1227 = vmatprep.subr.mxu0 0.0
        %1228 = vmatpush1.xpose.msra.mxu0 0.0
        %1229 = vmatprep.subr.mxu0 0.0
        %1230 = vmatpush1.xpose.msra.mxu0 0.0
        %1231 = vmatprep.subr.mxu0 0.0
        %1232 = vmatpush1.xpose.msra.mxu0 0.0
        %1233 = vmatprep.subr.mxu0 0.0
        %1234 = vmatpush1.xpose.msra.mxu0 0.0
        %1235 = vmatprep.subr.mxu0 0.0
        %1236 = vmatpush1.xpose.msra.mxu0 0.0
        %1237 = vmatprep.subr.mxu0 0.0
        %1238 = vmatpush1.xpose.msra.mxu0 0.0
        %1239 = vmatprep.subr.mxu0 0.0
        %1240 = vmatpush1.xpose.msra.mxu0 0.0
        %1241 = vmatprep.subr.mxu0 0.0
        %1242 = vmatpush1.xpose.msra.mxu0 0.0
        %1243 = vmatprep.subr.mxu0 0.0
        %1244 = vmatpush1.xpose.msra.mxu0 0.0
        %1245 = vmatprep.subr.mxu0 0.0
        %1246 = vmatpush1.xpose.msra.mxu0 0.0
        %1247 = vmatprep.subr.mxu0 0.0
        %1248 = vmatpush1.xpose.msra.mxu0 0.0
        %1249 = vmatprep.subr.mxu0 0.0
        %1250 = vmatpush1.xpose.msra.mxu0 0.0
        %1251 = vmatprep.subr.mxu0 0.0
        %1252 = vmatpush1.xpose.msra.mxu0 0.0
        %1253 = vmatprep.subr.mxu0 0.0
        %1254 = vmatpush1.xpose.msra.mxu0 0.0
        %1255 = vmatprep.subr.mxu0 0.0
        %1256 = vmatpush1.xpose.msra.mxu0 0.0
        %1257 = vmatprep.subr.mxu0 0.0
        %1258 = vmatpush1.xpose.msra.mxu0 0.0
        %1259 = vmatprep.subr.mxu0 0.0
        %1260 = vmatpush1.xpose.msra.mxu0 0.0
        %1261 = vmatprep.subr.mxu0 0.0
        %1262 = vmatpush1.xpose.msra.mxu0 0.0
        %1263 = vmatprep.subr.mxu0 0.0
        %1264 = vmatpush1.xpose.msra.mxu0 0.0
        %1265 = vmatprep.subr.mxu0 0.0
        %1266 = vmatpush1.xpose.msra.mxu0 0.0
        %1267 = vmatprep.subr.mxu0 0.0
        %1268 = vmatpush1.xpose.msra.mxu0 0.0
        %1269 = vmatprep.subr.mxu0 0.0
        %1270 = vmatpush1.xpose.msra.mxu0 0.0
        %1271 = vmatprep.subr.mxu0 0.0
        %1272 = vmatpush1.xpose.msra.mxu0 0.0
        %1273 = vmatprep.subr.mxu0 0.0
        %1274 = vmatpush1.xpose.msra.mxu0 0.0
        %1275 = vmatprep.mubr.f32.mxu0 0.0
        %1276 = vmatmul.mubr.f32.gmra.mrb[0].mxu0 %v1207
        %v1277 = vpop.f32.mrb[0].mxu0
        %v1278 = vadd.f32 0.0, %v1277
        %v1279 = vpop.f32.mrb[0].mxu0
        %1280 = vdwg.mxu0
        %v1281 = vmul.f32 %v1278, 0.25
        %v1282 = vsel %vm785, %v1281, -inf
        %1283 = vmax.xlane.f32.xlu0 %v1282
        %v1284 = vpop.xlane.xlu0 %1283
        %v1285 = vsub.f32 %v1281, %v1284
        %v1286 = vmul.f32 %v1285, 1.442695
        %v1287 = vpow.pop %v1286
        %v1288 = vsel %vm785, %v1287, 0.0
        %1289 = vadd.xlane.f32.xlu0 %v1288
        %v1290 = vpop.xlane.xlu0 %1289
        %1291 = vrot.lane.b32.xlu0 %v706, 80
        %v1292 = vpop.permute.xlu0 %1291
        %v1295 = vsel %vm785, %v1287, 0
        %1297 = vmatprep.subr.mxu0 0.0
        %1298 = vmatpush1.msra.mxu0 %v1292
        %1299 = vmatprep.subr.mxu0 0.0
        %1300 = vmatpush1.msra.mxu0 0.0
        %1301 = vmatprep.subr.mxu0 0.0
        %1302 = vmatpush1.msra.mxu0 0.0
        %1303 = vmatprep.subr.mxu0 0.0
        %1304 = vmatpush1.msra.mxu0 0.0
        %1305 = vmatprep.subr.mxu0 0.0
        %1306 = vmatpush1.msra.mxu0 0.0
        %1307 = vmatprep.subr.mxu0 0.0
        %1308 = vmatpush1.msra.mxu0 0.0
        %1309 = vmatprep.subr.mxu0 0.0
        %1310 = vmatpush1.msra.mxu0 0.0
        %1311 = vmatprep.subr.mxu0 0.0
        %1312 = vmatpush1.msra.mxu0 0.0
        %1313 = vmatprep.subr.mxu0 0.0
        %1314 = vmatpush1.msra.mxu0 0.0
        %1315 = vmatprep.subr.mxu0 0.0
        %1316 = vmatpush1.msra.mxu0 0.0
        %1317 = vmatprep.subr.mxu0 0.0
        %1318 = vmatpush1.msra.mxu0 0.0
        %1319 = vmatprep.subr.mxu0 0.0
        %1320 = vmatpush1.msra.mxu0 0.0
        %1321 = vmatprep.subr.mxu0 0.0
        %1322 = vmatpush1.msra.mxu0 0.0
        %1323 = vmatprep.subr.mxu0 0.0
        %1324 = vmatpush1.msra.mxu0 0.0
        %1325 = vmatprep.subr.mxu0 0.0
        %1326 = vmatpush1.msra.mxu0 0.0
        %1327 = vmatprep.subr.mxu0 0.0
        %1328 = vmatpush1.msra.mxu0 0.0
        %1329 = vmatprep.subr.mxu0 0.0
        %1330 = vmatpush1.msra.mxu0 0.0
        %1331 = vmatprep.subr.mxu0 0.0
        %1332 = vmatpush1.msra.mxu0 0.0
        %1333 = vmatprep.subr.mxu0 0.0
        %1334 = vmatpush1.msra.mxu0 0.0
        %1335 = vmatprep.subr.mxu0 0.0
        %1336 = vmatpush1.msra.mxu0 0.0
        %1337 = vmatprep.subr.mxu0 0.0
        %1338 = vmatpush1.msra.mxu0 0.0
        %1339 = vmatprep.subr.mxu0 0.0
        %1340 = vmatpush1.msra.mxu0 0.0
        %1341 = vmatprep.subr.mxu0 0.0
        %1342 = vmatpush1.msra.mxu0 0.0
        %1343 = vmatprep.subr.mxu0 0.0
        %1344 = vmatpush1.msra.mxu0 0.0
        %1345 = vmatprep.subr.mxu0 0.0
        %1346 = vmatpush1.msra.mxu0 0.0
        %1347 = vmatprep.subr.mxu0 0.0
        %1348 = vmatpush1.msra.mxu0 0.0
        %1349 = vmatprep.subr.mxu0 0.0
        %1350 = vmatpush1.msra.mxu0 0.0
        %1351 = vmatprep.subr.mxu0 0.0
        %1352 = vmatpush1.msra.mxu0 0.0
        %1353 = vmatprep.subr.mxu0 0.0
        %1354 = vmatpush1.msra.mxu0 0.0
        %1355 = vmatprep.subr.mxu0 0.0
        %1356 = vmatpush1.msra.mxu0 0.0
        %1357 = vmatprep.subr.mxu0 0.0
        %1358 = vmatpush1.msra.mxu0 0.0
        %1359 = vmatprep.subr.mxu0 0.0
        %1360 = vmatpush1.msra.mxu0 0.0
        %1361 = vmatprep.mubr.f32.mxu0 0.0
        %1362 = vmatmul.mubr.f32.gmra.mrb[0].mxu0 %v1295
        %v1363 = vpop.f32.mrb[0].mxu0
        %v1364 = vadd.f32 0.0, %v1363
        %v1365 = vpop.f32.mrb[0].mxu0
        %1366 = vdwg.mxu0
        %v1367 = vrcp.pop %v1290
        %v1368 = vmul.f32 %v1364, %v1367
        %1370 = vrot.lane.b32.xlu0 %v1036, 16
        %v1371 = vpop.permute.xlu0 %1370
        %1374 = vrot.lane.b32.xlu0 %v1202, 32
        %v1375 = vpop.permute.xlu0 %1374
        %1378 = vrot.lane.b32.xlu0 %v1368, 48
        %v1379 = vpop.permute.xlu0 %1378
        %v1381 = vsel %vm707, %v869, %v1371
        %v1382 = vsel %vm631, %v1381, %v1375
        %vm1383 = vcmask 392192
        %v1384 = vsel %vm1383, %v1382, %v1379
        %v1385 = vld [vmem:[%s9] sm:$0xff]
        %v1386 = vld [vmem:[%s9 + $0x8] sm:$0xff]
        %v1387 = vld [vmem:[%s9 + $0x10] sm:$0xff]
        %v1388 = vld [vmem:[%s9 + $0x18] sm:$0xff]
        %v1389 = vld [vmem:[%s9 + $0x20] sm:$0xff]
        %v1390 = vld [vmem:[%s9 + $0x28] sm:$0xff]
        %v1391 = vld [vmem:[%s9 + $0x30] sm:$0xff]
        %v1392 = vld [vmem:[%s9 + $0x38] sm:$0xff]
        %v1393 = vld [vmem:[%s10] sm:$0x1]
        %v1395 = vlaneseq
        %v1396 = vshrl.u32 %v1395, 7
        %v1397 = vsub.s32 0, %v1396
        %v1398 = vrot.slane %v1393, %v1397
        %vm1400 = vcmask 523264
        %v1402 = vsel %vm1400, %v1384, 0
        %1404 = vmatprep.subr.mxu0 0.0
        %1405 = vmatpush1.msra.mxu0 %v1385
        %1406 = vmatprep.subr.mxu0 0.0
        %1407 = vmatpush1.msra.mxu0 %v1386
        %1408 = vmatprep.subr.mxu0 0.0
        %1409 = vmatpush1.msra.mxu0 %v1387
        %1410 = vmatprep.subr.mxu0 0.0
        %1411 = vmatpush1.msra.mxu0 %v1388
        %1412 = vmatprep.subr.mxu0 0.0
        %1413 = vmatpush1.msra.mxu0 %v1389
        %1414 = vmatprep.subr.mxu0 0.0
        %1415 = vmatpush1.msra.mxu0 %v1390
        %1416 = vmatprep.subr.mxu0 0.0
        %1417 = vmatpush1.msra.mxu0 %v1391
        %1418 = vmatprep.subr.mxu0 0.0
        %1419 = vmatpush1.msra.mxu0 %v1392
        %1420 = vmatprep.subr.mxu0 0.0
        %1421 = vmatpush1.msra.mxu0 0.0
        %1422 = vmatprep.subr.mxu0 0.0
        %1423 = vmatpush1.msra.mxu0 0.0
        %1424 = vmatprep.subr.mxu0 0.0
        %1425 = vmatpush1.msra.mxu0 0.0
        %1426 = vmatprep.subr.mxu0 0.0
        %1427 = vmatpush1.msra.mxu0 0.0
        %1428 = vmatprep.subr.mxu0 0.0
        %1429 = vmatpush1.msra.mxu0 0.0
        %1430 = vmatprep.subr.mxu0 0.0
        %1431 = vmatpush1.msra.mxu0 0.0
        %1432 = vmatprep.subr.mxu0 0.0
        %1433 = vmatpush1.msra.mxu0 0.0
        %1434 = vmatprep.subr.mxu0 0.0
        %1435 = vmatpush1.msra.mxu0 0.0
        %1436 = vmatprep.subr.mxu0 0.0
        %1437 = vmatpush1.msra.mxu0 0.0
        %1438 = vmatprep.subr.mxu0 0.0
        %1439 = vmatpush1.msra.mxu0 0.0
        %1440 = vmatprep.subr.mxu0 0.0
        %1441 = vmatpush1.msra.mxu0 0.0
        %1442 = vmatprep.subr.mxu0 0.0
        %1443 = vmatpush1.msra.mxu0 0.0
        %1444 = vmatprep.subr.mxu0 0.0
        %1445 = vmatpush1.msra.mxu0 0.0
        %1446 = vmatprep.subr.mxu0 0.0
        %1447 = vmatpush1.msra.mxu0 0.0
        %1448 = vmatprep.subr.mxu0 0.0
        %1449 = vmatpush1.msra.mxu0 0.0
        %1450 = vmatprep.subr.mxu0 0.0
        %1451 = vmatpush1.msra.mxu0 0.0
        %1452 = vmatprep.subr.mxu0 0.0
        %1453 = vmatpush1.msra.mxu0 0.0
        %1454 = vmatprep.subr.mxu0 0.0
        %1455 = vmatpush1.msra.mxu0 0.0
        %1456 = vmatprep.subr.mxu0 0.0
        %1457 = vmatpush1.msra.mxu0 0.0
        %1458 = vmatprep.subr.mxu0 0.0
        %1459 = vmatpush1.msra.mxu0 0.0
        %1460 = vmatprep.subr.mxu0 0.0
        %1461 = vmatpush1.msra.mxu0 0.0
        %1462 = vmatprep.subr.mxu0 0.0
        %1463 = vmatpush1.msra.mxu0 0.0
        %1464 = vmatprep.subr.mxu0 0.0
        %1465 = vmatpush1.msra.mxu0 0.0
        %1466 = vmatprep.subr.mxu0 0.0
        %1467 = vmatpush1.msra.mxu0 0.0
        %1468 = vmatprep.mubr.f32.mxu0 0.0
        %1469 = vmatmul.mubr.f32.gmra.mrb[0].mxu0 %v1402
        %v1470 = vpop.f32.mrb[0].mxu0
        %v1471 = vadd.f32 %v1398, %v1470
        %v1472 = vpop.f32.mrb[0].mxu0
        %1473 = vdwg.mxu0
        %1474 = vst.msk [vmem:[%s425] sm:$0xff] %vm631, %v1471
        %s1475 = sand.u32 %s295, 1
        %s1476 = scalar_lea.sflag [#allocation5], %s1475
        %s1477 = sand.u32 %s295, 1
        %s1478 = smul.addr %s1477, 8
        %s1479 = scalar_lea.vmem [#allocation4], %s1478
        // Predicated region
        $region69: #{multi_head_attention.1} parent=63 // pred_check
          %p1480 = pneg %p305
        $region70: #{multi_head_attention.1} parent=63 // pred_check_branch
          %1482 = sbr.rel (%p1480) target = $region72
        $region71: #{multi_head_attention.1} parent=63 // pred_region
          %s1484 = ssub.s32 128, 128
          %1485 = vsyncadd %s1476, %s1484
          %s1486 = sadd.s32 %s30, %s29
          %s1487 = smul.addr %s1486, 128
          %s1488 = scalar_lea.hbm %s11, %s1487
          %s1490 = sshll.u32 %s1479, 4
          %s1491 = int_to_ptr.vmem [resolvable:$true] %s1490
          %1493 = dma.vmem_to_hbm [thread:$0]  %s1491, 128, %s1488, %s1476
        $region72: #{multi_head_attention.1} parent=63 // pred_fallthru
          _
      $region64: #{multi_head_attention.1} parent=5 // pred_fallthru
        _
      %p1494 = scmp.le.s32.totalorder 2, %s20
      // Predicated region
      $region73: #{multi_head_attention.1} parent=5 // pred_check
        %p1495 = pneg %p1494
      $region74: #{multi_head_attention.1} parent=5 // pred_check_branch
        %1497 = sbr.rel (%p1495) target = $region76
      $region75: #{multi_head_attention.1} parent=5 // pred_region
        %s1498 = ssub.s32 %s20, 2
        // Predicated region
        $region77: #{multi_head_attention.1} parent=75 // pred_check
          %p1499 = pneg %p311
        $region78: #{multi_head_attention.1} parent=75 // pred_check_branch
          %1501 = sbr.rel (%p1499) target = $region80
        $region79: #{multi_head_attention.1} parent=75 // pred_region
          %s1502 = sand.u32 %s296, 1
          %s1503 = scalar_lea.sflag [#allocation5], %s1502
          %s1504 = sand.u32 %s296, 1
          %s1505 = smul.addr %s1504, 8
          %s1506 = scalar_lea.vmem [#allocation4], %s1505
          %1507 = dma.done %s1503, 128
        $region80: #{multi_head_attention.1} parent=75 // pred_fallthru
          _
      $region76: #{multi_head_attention.1} parent=5 // pred_fallthru
        _
    $region6: #{multi_head_attention.1} parent=1 // loop_footer
      %s24 = sadd.s32 1, %s20
    $region7: #{multi_head_attention.1} parent=1 // loop_footer_branch
      %19 = sbr.rel target = $region3
    $region8: #{multi_head_attention.1} parent=1 // loop_exit
      _
    %1508 = vsyncpa [#allocation5], 1
    %s1509 = scalar_lea.sflag [#allocation5], 1
    %1510 = vsyncpa %s1509, 1

</llo_original>
